<compile_context>
chip_gen: v7x
topology: tpu7x:2x2x1
jax: 0.10.0
libtpu: 0.0.40
codegen_flags: <defaults>
</compile_context>

<pallas_src>
import jax
import jax.numpy as jnp
from jax.experimental import pallas as pl
from jax.experimental.pallas import tpu as pltpu

NUM_EMB = 128      # vocabulary size V
EMBED_DIM = 16
HIDDEN = 64
NUM_LAYERS = 5
SEQ_LEN = 2        # fc1 expects T * HIDDEN == 128  =>  T = 2
BATCH = 4


def lstm_kernel(ids_ref, w0_ref, wih_ref, whh_ref, b_ref,
                w1_ref, b1_ref, w2_ref, b2_ref, out_ref,
                lay_scratch, seq_scratch):
    """Whole forward pass for one small batch, entirely in VMEM.

    ids_ref : (T*B, 1) int32   token ids, time-major rows (row = t*B + b)
    w0_ref  : (V, 256)         fused  embed @ W_ih(layer0)  (gate-permuted)
    wih_ref : (L-1, 64, 256)   input->gates weights, layers 1..4 (transposed)
    whh_ref : (L, 64, 256)     hidden->gates weights (transposed)
    b_ref   : (L, 1, 256)      b_ih + b_hh (gate-permuted)
    w1_ref  : (128, V), b1_ref: (1, V)   fc1
    w2_ref  : (V, V),   b2_ref: (1, V)   fc2
    out_ref : (B, V)
    lay_scratch: VMEM (T*B, 64)   per-layer output block (next layer's input)
    seq_scratch: VMEM (B, T*64)   lane-dense flattened last-layer output
    """
    B = BATCH
    T = SEQ_LEN
    H = HIDDEN
    TB = T * B

    # --- embedding gather fused with layer-0 input projection (one matmul) ---
    # one_hot(ids) @ (E @ W_ih0)  ==  E[ids] @ W_ih0   (exact row selection)
    lane = jax.lax.broadcasted_iota(jnp.int32, (TB, NUM_EMB), 1)
    onehot = (lane == ids_ref[...]).astype(jnp.float32)          # (TB, V)
    xproj = jnp.dot(onehot, w0_ref[...],
                    preferred_element_type=jnp.float32) + b_ref[0]   # (TB, 4H)

    for l in range(NUM_LAYERS):            # static Python loop -> unrolled
        whh = whh_ref[l]                   # (64, 256)
        h = jnp.zeros((B, H), jnp.float32)
        c = jnp.zeros((B, H), jnp.float32)
        for t in range(T):                 # static, T = 2
            gates = xproj[t * B:(t + 1) * B, :] + jnp.dot(
                h, whh, preferred_element_type=jnp.float32)       # (B, 4H)
            # Gate columns were permuted at init: [i, f, o | g].
            sig = jax.nn.sigmoid(gates[:, :3 * H])                # one EUP slab
            g_g = jnp.tanh(gates[:, 3 * H:])                      # one EUP slab
            i_g = sig[:, 0 * H:1 * H]
            f_g = sig[:, 1 * H:2 * H]
            o_g = sig[:, 2 * H:3 * H]
            c = f_g * c + i_g * g_g
            h = o_g * jnp.tanh(c)
            if l < NUM_LAYERS - 1:
                lay_scratch[t * B:(t + 1) * B, :] = h             # (T*B, 64)
            else:
                seq_scratch[:, t * H:(t + 1) * H] = h             # (B, T*H)
        if l < NUM_LAYERS - 1:
            # Fused input projection for the next layer: both timesteps at once.
            xproj = jnp.dot(lay_scratch[...], wih_ref[l],
                            preferred_element_type=jnp.float32) + b_ref[l + 1]

    # (B, T*H) = (4, 128), already lane-dense — same as torch.reshape(x, (B, -1))
    seq = seq_scratch[...]

    z = jnp.dot(seq, w1_ref[...], preferred_element_type=jnp.float32) + b1_ref[...]
    z = jnp.maximum(z, 0.0)                                       # ReLU
    out_ref[...] = (jnp.dot(z, w2_ref[...], preferred_element_type=jnp.float32)
                    + b2_ref[...])


def init_params(key):
    ks = jax.random.split(key, 8)
    kinv = 1.0 / jnp.sqrt(jnp.float32(HIDDEN))
    H = HIDDEN

    def unif(k, shape, bound):
        return jax.random.uniform(k, shape, jnp.float32, -bound, bound)

    def permute_gates(w_t):
        # torch gate order along last axis: [i, f, g, o] -> kernel order [i, f, o, g]
        return jnp.concatenate(
            [w_t[..., 0:2 * H], w_t[..., 3 * H:4 * H], w_t[..., 2 * H:3 * H]],
            axis=-1)

    # Embedding table (V, 16), N(0,1) like nn.Embedding default.
    embed = jax.random.normal(ks[0], (NUM_EMB, EMBED_DIM), jnp.float32)

    layer_keys = jax.random.split(ks[1], NUM_LAYERS * 4).reshape(NUM_LAYERS, 4, 2)
    wih_t, whh_t, b_list = [], [], []
    for l in range(NUM_LAYERS):
        in_dim = EMBED_DIM if l == 0 else HIDDEN
        w_ih = unif(layer_keys[l, 0], (4 * H, in_dim), kinv)    # torch layout
        w_hh = unif(layer_keys[l, 1], (4 * H, H), kinv)
        b_ih = unif(layer_keys[l, 2], (4 * H,), kinv)
        b_hh = unif(layer_keys[l, 3], (4 * H,), kinv)
        wih_t.append(permute_gates(w_ih.T))                     # (in_dim, 4H)
        whh_t.append(permute_gates(w_hh.T))                     # (H, 4H)
        b_list.append(permute_gates((b_ih + b_hh).reshape(1, 4 * H)))

    # Fold the embedding table into layer-0's input weight:
    #   one_hot(ids) @ (E @ W_ih0) == E[ids] @ W_ih0
    w0_fused = jnp.dot(embed, wih_t[0],
                       precision=jax.lax.Precision.HIGHEST)     # (V, 4H)

    flat = SEQ_LEN * HIDDEN        # 128
    k1 = 1.0 / jnp.sqrt(jnp.float32(flat))
    k2 = 1.0 / jnp.sqrt(jnp.float32(NUM_EMB))
    w1 = unif(ks[2], (NUM_EMB, flat), k1).T           # (128, V)
    b1 = unif(ks[3], (NUM_EMB,), k1).reshape(1, NUM_EMB)
    w2 = unif(ks[4], (NUM_EMB, NUM_EMB), k2).T        # (V, V)
    b2 = unif(ks[5], (NUM_EMB,), k2).reshape(1, NUM_EMB)

    return dict(embed=embed,
                w0ih=wih_t[0],                        # (16, 256)   reference only
                w0_fused=w0_fused,                    # (128, 256)  kernel layer 0
                wih=jnp.stack(wih_t[1:]),             # (4, 64, 256)
                whh=jnp.stack(whh_t),                 # (5, 64, 256)
                b=jnp.stack(b_list),                  # (5, 1, 256)
                w1=w1, b1=b1, w2=w2, b2=b2)


def lstm_forward(x_ids, params):
    B, T = x_ids.shape
    # Time-major token ids (row = t*B + b); the gather happens inside the kernel.
    ids_tb = x_ids.T.reshape(T * B, 1).astype(jnp.int32)

    vmem = pl.BlockSpec(memory_space=pltpu.MemorySpace.VMEM)
    out = pl.pallas_call(
        lstm_kernel,
        out_shape=jax.ShapeDtypeStruct((B, NUM_EMB), jnp.float32),
        in_specs=[vmem] * 9,
        out_specs=vmem,
        scratch_shapes=[pltpu.VMEM((T * B, HIDDEN), jnp.float32),
                        pltpu.VMEM((B, T * HIDDEN), jnp.float32)],
    )(ids_tb, params["w0_fused"], params["wih"], params["whh"], params["b"],
      params["w1"], params["b1"], params["w2"], params["b2"])
    return out


def lstm_forward_ref(x_ids, params):
    """Pure-JAX reference mirroring the PyTorch semantics (gate permutation is a
    pure relabeling of columns, so the math is the standard i/f/g/o LSTM)."""
    B, T = x_ids.shape
    H = HIDDEN
    hi = jax.lax.Precision.HIGHEST
    emb = jnp.take(params["embed"], x_ids, axis=0)                # (B, T, 16)
    layer_in = [emb[:, t, :] for t in range(T)]
    for l in range(NUM_LAYERS):
        wih = params["w0ih"] if l == 0 else params["wih"][l - 1]
        whh = params["whh"][l]
        b = params["b"][l]
        h = jnp.zeros((B, H), jnp.float32)
        c = jnp.zeros((B, H), jnp.float32)
        outs = []
        for t in range(T):
            g = (jnp.dot(layer_in[t], wih, precision=hi)
                 + jnp.dot(h, whh, precision=hi) + b)
            i_g = jax.nn.sigmoid(g[:, 0 * H:1 * H])
            f_g = jax.nn.sigmoid(g[:, 1 * H:2 * H])
            o_g = jax.nn.sigmoid(g[:, 2 * H:3 * H])
            g_g = jnp.tanh(g[:, 3 * H:4 * H])
            c = f_g * c + i_g * g_g
            h = o_g * jnp.tanh(c)
            outs.append(h)
        layer_in = outs
    seq = jnp.concatenate(layer_in, axis=-1)                      # (B, T*H)
    z = jnp.maximum(jnp.dot(seq, params["w1"], precision=hi) + params["b1"], 0.0)
    return jnp.dot(z, params["w2"], precision=hi) + params["b2"]


if __name__ == "__main__":
    key = jax.random.PRNGKey(0)
    pkey, xkey = jax.random.split(key)
    params = init_params(pkey)

    # Token ids, shape (B, T) = (4, 2)
    x_ids = jax.random.randint(xkey, (BATCH, SEQ_LEN), 0, NUM_EMB, dtype=jnp.int32)

    out = jax.block_until_ready(lstm_forward(x_ids, params))
    ref = jax.block_until_ready(lstm_forward_ref(x_ids, params))

    assert out.shape == (BATCH, NUM_EMB), out.shape
    assert bool(jnp.all(jnp.isfinite(out)))
    assert bool(jnp.allclose(out, ref, rtol=1e-4, atol=1e-4)), \
        float(jnp.max(jnp.abs(out - ref)))
    print("KERNEL_OK")
</pallas_src>

<mosaic_0001>
module attributes {stable_mosaic.version = 11 : i64} {
  func.func @lstm_kernel(%arg0: memref<8x1xi32, #tpu.memory_space<vmem>>, %arg1: memref<128x256xf32, #tpu.memory_space<vmem>>, %arg2: memref<4x64x256xf32, #tpu.memory_space<vmem>>, %arg3: memref<5x64x256xf32, #tpu.memory_space<vmem>>, %arg4: memref<5x1x256xf32, #tpu.memory_space<vmem>>, %arg5: memref<128x128xf32, #tpu.memory_space<vmem>>, %arg6: memref<1x128xf32, #tpu.memory_space<vmem>>, %arg7: memref<128x128xf32, #tpu.memory_space<vmem>>, %arg8: memref<1x128xf32, #tpu.memory_space<vmem>>, %arg9: memref<4x128xf32, #tpu.memory_space<vmem>>, %arg10: memref<8x64xf32, #tpu.memory_space<vmem>>, %arg11: memref<4x128xf32, #tpu.memory_space<vmem>>) attributes {dimension_semantics = [], scalar_prefetch = 0 : i64, scratch_operands = 2 : i64, tpu.core_type = #tpu.core_type<tc>} {
    %0 = tpu.iota {dimensions = array<i32: 1>} : vector<8x128xi32>
    %c0 = arith.constant 0 : index
    %c0_0 = arith.constant 0 : index
    %1 = vector.load %arg0[%c0, %c0_0] : memref<8x1xi32, #tpu.memory_space<vmem>>, vector<8x1xi32>
    %2 = vector.broadcast %1 : vector<8x1xi32> to vector<8x128xi32>
    %3 = arith.cmpi eq, %0, %2 : vector<8x128xi32>
    %4 = arith.extui %3 : vector<8x128xi1> to vector<8x128xi32>
    %5 = arith.sitofp %4 : vector<8x128xi32> to vector<8x128xf32>
    %c0_1 = arith.constant 0 : index
    %c0_2 = arith.constant 0 : index
    %6 = vector.load %arg1[%c0_1, %c0_2] : memref<128x256xf32, #tpu.memory_space<vmem>>, vector<128x256xf32>
    %cst = arith.constant dense<0.000000e+00> : vector<8x256xf32>
    %7 = tpu.matmul %5, %6, %cst {dimension_numbers = #tpu.dot_dimension_numbers<[1], [0], [0], [1], [0, 0, 1, 1], [], []>} : vector<8x128xf32>, vector<128x256xf32>, vector<8x256xf32> -> vector<8x256xf32>
    %c0_3 = arith.constant 0 : index
    %c0_4 = arith.constant 0 : index
    %c0_5 = arith.constant 0 : index
    %8 = vector.load %arg4[%c0_3, %c0_4, %c0_5] : memref<5x1x256xf32, #tpu.memory_space<vmem>>, vector<1x1x256xf32>
    %9 = vector.shape_cast %8 : vector<1x1x256xf32> to vector<1x256xf32>
    %10 = vector.broadcast %9 : vector<1x256xf32> to vector<8x256xf32>
    %11 = arith.addf %7, %10 : vector<8x256xf32>
    %c0_6 = arith.constant 0 : index
    %c0_7 = arith.constant 0 : index
    %c0_8 = arith.constant 0 : index
    %12 = vector.load %arg3[%c0_6, %c0_7, %c0_8] : memref<5x64x256xf32, #tpu.memory_space<vmem>>, vector<1x64x256xf32>
    %13 = vector.shape_cast %12 : vector<1x64x256xf32> to vector<64x256xf32>
    %cst_9 = arith.constant 0.000000e+00 : f32
    %14 = vector.broadcast %cst_9 : f32 to vector<4x64xf32>
    %cst_10 = arith.constant 0.000000e+00 : f32
    %15 = vector.broadcast %cst_10 : f32 to vector<4x64xf32>
    %16 = vector.extract_strided_slice %11 {offsets = [0, 0], sizes = [4, 256], strides = [1, 1]} : vector<8x256xf32> to vector<4x256xf32>
    %cst_11 = arith.constant dense<0.000000e+00> : vector<4x256xf32>
    %17 = tpu.matmul %14, %13, %cst_11 {dimension_numbers = #tpu.dot_dimension_numbers<[1], [0], [0], [1], [0, 0, 1, 1], [], []>} : vector<4x64xf32>, vector<64x256xf32>, vector<4x256xf32> -> vector<4x256xf32>
    %18 = arith.addf %16, %17 : vector<4x256xf32>
    %19 = vector.extract_strided_slice %18 {offsets = [0, 0], sizes = [4, 192], strides = [1, 1]} : vector<4x256xf32> to vector<4x192xf32>
    %20 = arith.negf %19 : vector<4x192xf32>
    %21 = math.exp %20 : vector<4x192xf32>
    %cst_12 = arith.constant 1.000000e+00 : f32
    %22 = vector.broadcast %cst_12 : f32 to vector<4x192xf32>
    %23 = arith.addf %22, %21 : vector<4x192xf32>
    %24 = arith.divf %22, %23 : vector<4x192xf32>
    %25 = vector.extract_strided_slice %18 {offsets = [0, 192], sizes = [4, 64], strides = [1, 1]} : vector<4x256xf32> to vector<4x64xf32>
    %26 = math.tanh %25 : vector<4x64xf32>
    %27 = vector.extract_strided_slice %24 {offsets = [0, 0], sizes = [4, 64], strides = [1, 1]} : vector<4x192xf32> to vector<4x64xf32>
    %28 = vector.extract_strided_slice %24 {offsets = [0, 64], sizes = [4, 64], strides = [1, 1]} : vector<4x192xf32> to vector<4x64xf32>
    %29 = vector.extract_strided_slice %24 {offsets = [0, 128], sizes = [4, 64], strides = [1, 1]} : vector<4x192xf32> to vector<4x64xf32>
    %30 = arith.mulf %28, %15 : vector<4x64xf32>
    %31 = arith.mulf %27, %26 : vector<4x64xf32>
    %32 = arith.addf %30, %31 : vector<4x64xf32>
    %33 = math.tanh %32 : vector<4x64xf32>
    %34 = arith.mulf %29, %33 : vector<4x64xf32>
    %c0_13 = arith.constant 0 : index
    %c0_14 = arith.constant 0 : index
    %35 = vector.load %arg10[%c0_13, %c0_14] : memref<8x64xf32, #tpu.memory_space<vmem>>, vector<4x64xf32>
    tpu.vector_store %arg10[%c0_13, %c0_14], %34 {strides = array<i32>} : memref<8x64xf32, #tpu.memory_space<vmem>>, vector<4x64xf32>,
    %36 = vector.extract_strided_slice %11 {offsets = [4, 0], sizes = [4, 256], strides = [1, 1]} : vector<8x256xf32> to vector<4x256xf32>
    %cst_15 = arith.constant dense<0.000000e+00> : vector<4x256xf32>
    %37 = tpu.matmul %34, %13, %cst_15 {dimension_numbers = #tpu.dot_dimension_numbers<[1], [0], [0], [1], [0, 0, 1, 1], [], []>} : vector<4x64xf32>, vector<64x256xf32>, vector<4x256xf32> -> vector<4x256xf32>
    %38 = arith.addf %36, %37 : vector<4x256xf32>
    %39 = vector.extract_strided_slice %38 {offsets = [0, 0], sizes = [4, 192], strides = [1, 1]} : vector<4x256xf32> to vector<4x192xf32>
    %40 = arith.negf %39 : vector<4x192xf32>
    %41 = math.exp %40 : vector<4x192xf32>
    %cst_16 = arith.constant 1.000000e+00 : f32
    %42 = vector.broadcast %cst_16 : f32 to vector<4x192xf32>
    %43 = arith.addf %42, %41 : vector<4x192xf32>
    %44 = arith.divf %42, %43 : vector<4x192xf32>
    %45 = vector.extract_strided_slice %38 {offsets = [0, 192], sizes = [4, 64], strides = [1, 1]} : vector<4x256xf32> to vector<4x64xf32>
    %46 = math.tanh %45 : vector<4x64xf32>
    %47 = vector.extract_strided_slice %44 {offsets = [0, 0], sizes = [4, 64], strides = [1, 1]} : vector<4x192xf32> to vector<4x64xf32>
    %48 = vector.extract_strided_slice %44 {offsets = [0, 64], sizes = [4, 64], strides = [1, 1]} : vector<4x192xf32> to vector<4x64xf32>
    %49 = vector.extract_strided_slice %44 {offsets = [0, 128], sizes = [4, 64], strides = [1, 1]} : vector<4x192xf32> to vector<4x64xf32>
    %50 = arith.mulf %48, %32 : vector<4x64xf32>
    %51 = arith.mulf %47, %46 : vector<4x64xf32>
    %52 = arith.addf %50, %51 : vector<4x64xf32>
    %53 = math.tanh %52 : vector<4x64xf32>
    %54 = arith.mulf %49, %53 : vector<4x64xf32>
    %c4 = arith.constant 4 : index
    %c0_17 = arith.constant 0 : index
    %55 = vector.load %arg10[%c4, %c0_17] : memref<8x64xf32, #tpu.memory_space<vmem>>, vector<4x64xf32>
    tpu.vector_store %arg10[%c4, %c0_17], %54 {strides = array<i32>} : memref<8x64xf32, #tpu.memory_space<vmem>>, vector<4x64xf32>,
    %c0_18 = arith.constant 0 : index
    %c0_19 = arith.constant 0 : index
    %56 = vector.load %arg10[%c0_18, %c0_19] : memref<8x64xf32, #tpu.memory_space<vmem>>, vector<8x64xf32>
    %c0_20 = arith.constant 0 : index
    %c0_21 = arith.constant 0 : index
    %c0_22 = arith.constant 0 : index
    %57 = vector.load %arg2[%c0_20, %c0_21, %c0_22] : memref<4x64x256xf32, #tpu.memory_space<vmem>>, vector<1x64x256xf32>
    %58 = vector.shape_cast %57 : vector<1x64x256xf32> to vector<64x256xf32>
    %cst_23 = arith.constant dense<0.000000e+00> : vector<8x256xf32>
    %59 = tpu.matmul %56, %58, %cst_23 {dimension_numbers = #tpu.dot_dimension_numbers<[1], [0], [0], [1], [0, 0, 1, 1], [], []>} : vector<8x64xf32>, vector<64x256xf32>, vector<8x256xf32> -> vector<8x256xf32>
    %c1 = arith.constant 1 : index
    %c0_24 = arith.constant 0 : index
    %c0_25 = arith.constant 0 : index
    %60 = vector.load %arg4[%c1, %c0_24, %c0_25] : memref<5x1x256xf32, #tpu.memory_space<vmem>>, vector<1x1x256xf32>
    %61 = vector.shape_cast %60 : vector<1x1x256xf32> to vector<1x256xf32>
    %62 = vector.broadcast %61 : vector<1x256xf32> to vector<8x256xf32>
    %63 = arith.addf %59, %62 : vector<8x256xf32>
    %c1_26 = arith.constant 1 : index
    %c0_27 = arith.constant 0 : index
    %c0_28 = arith.constant 0 : index
    %64 = vector.load %arg3[%c1_26, %c0_27, %c0_28] : memref<5x64x256xf32, #tpu.memory_space<vmem>>, vector<1x64x256xf32>
    %65 = vector.shape_cast %64 : vector<1x64x256xf32> to vector<64x256xf32>
    %cst_29 = arith.constant 0.000000e+00 : f32
    %66 = vector.broadcast %cst_29 : f32 to vector<4x64xf32>
    %cst_30 = arith.constant 0.000000e+00 : f32
    %67 = vector.broadcast %cst_30 : f32 to vector<4x64xf32>
    %68 = vector.extract_strided_slice %63 {offsets = [0, 0], sizes = [4, 256], strides = [1, 1]} : vector<8x256xf32> to vector<4x256xf32>
    %cst_31 = arith.constant dense<0.000000e+00> : vector<4x256xf32>
    %69 = tpu.matmul %66, %65, %cst_31 {dimension_numbers = #tpu.dot_dimension_numbers<[1], [0], [0], [1], [0, 0, 1, 1], [], []>} : vector<4x64xf32>, vector<64x256xf32>, vector<4x256xf32> -> vector<4x256xf32>
    %70 = arith.addf %68, %69 : vector<4x256xf32>
    %71 = vector.extract_strided_slice %70 {offsets = [0, 0], sizes = [4, 192], strides = [1, 1]} : vector<4x256xf32> to vector<4x192xf32>
    %72 = arith.negf %71 : vector<4x192xf32>
    %73 = math.exp %72 : vector<4x192xf32>
    %cst_32 = arith.constant 1.000000e+00 : f32
    %74 = vector.broadcast %cst_32 : f32 to vector<4x192xf32>
    %75 = arith.addf %74, %73 : vector<4x192xf32>
    %76 = arith.divf %74, %75 : vector<4x192xf32>
    %77 = vector.extract_strided_slice %70 {offsets = [0, 192], sizes = [4, 64], strides = [1, 1]} : vector<4x256xf32> to vector<4x64xf32>
    %78 = math.tanh %77 : vector<4x64xf32>
    %79 = vector.extract_strided_slice %76 {offsets = [0, 0], sizes = [4, 64], strides = [1, 1]} : vector<4x192xf32> to vector<4x64xf32>
    %80 = vector.extract_strided_slice %76 {offsets = [0, 64], sizes = [4, 64], strides = [1, 1]} : vector<4x192xf32> to vector<4x64xf32>
    %81 = vector.extract_strided_slice %76 {offsets = [0, 128], sizes = [4, 64], strides = [1, 1]} : vector<4x192xf32> to vector<4x64xf32>
    %82 = arith.mulf %80, %67 : vector<4x64xf32>
    %83 = arith.mulf %79, %78 : vector<4x64xf32>
    %84 = arith.addf %82, %83 : vector<4x64xf32>
    %85 = math.tanh %84 : vector<4x64xf32>
    %86 = arith.mulf %81, %85 : vector<4x64xf32>
    %c0_33 = arith.constant 0 : index
    %c0_34 = arith.constant 0 : index
    %87 = vector.load %arg10[%c0_33, %c0_34] : memref<8x64xf32, #tpu.memory_space<vmem>>, vector<4x64xf32>
    tpu.vector_store %arg10[%c0_33, %c0_34], %86 {strides = array<i32>} : memref<8x64xf32, #tpu.memory_space<vmem>>, vector<4x64xf32>,
    %88 = vector.extract_strided_slice %63 {offsets = [4, 0], sizes = [4, 256], strides = [1, 1]} : vector<8x256xf32> to vector<4x256xf32>
    %cst_35 = arith.constant dense<0.000000e+00> : vector<4x256xf32>
    %89 = tpu.matmul %86, %65, %cst_35 {dimension_numbers = #tpu.dot_dimension_numbers<[1], [0], [0], [1], [0, 0, 1, 1], [], []>} : vector<4x64xf32>, vector<64x256xf32>, vector<4x256xf32> -> vector<4x256xf32>
    %90 = arith.addf %88, %89 : vector<4x256xf32>
    %91 = vector.extract_strided_slice %90 {offsets = [0, 0], sizes = [4, 192], strides = [1, 1]} : vector<4x256xf32> to vector<4x192xf32>
    %92 = arith.negf %91 : vector<4x192xf32>
    %93 = math.exp %92 : vector<4x192xf32>
    %cst_36 = arith.constant 1.000000e+00 : f32
    %94 = vector.broadcast %cst_36 : f32 to vector<4x192xf32>
    %95 = arith.addf %94, %93 : vector<4x192xf32>
    %96 = arith.divf %94, %95 : vector<4x192xf32>
    %97 = vector.extract_strided_slice %90 {offsets = [0, 192], sizes = [4, 64], strides = [1, 1]} : vector<4x256xf32> to vector<4x64xf32>
    %98 = math.tanh %97 : vector<4x64xf32>
    %99 = vector.extract_strided_slice %96 {offsets = [0, 0], sizes = [4, 64], strides = [1, 1]} : vector<4x192xf32> to vector<4x64xf32>
    %100 = vector.extract_strided_slice %96 {offsets = [0, 64], sizes = [4, 64], strides = [1, 1]} : vector<4x192xf32> to vector<4x64xf32>
    %101 = vector.extract_strided_slice %96 {offsets = [0, 128], sizes = [4, 64], strides = [1, 1]} : vector<4x192xf32> to vector<4x64xf32>
    %102 = arith.mulf %100, %84 : vector<4x64xf32>
    %103 = arith.mulf %99, %98 : vector<4x64xf32>
    %104 = arith.addf %102, %103 : vector<4x64xf32>
    %105 = math.tanh %104 : vector<4x64xf32>
    %106 = arith.mulf %101, %105 : vector<4x64xf32>
    %c4_37 = arith.constant 4 : index
    %c0_38 = arith.constant 0 : index
    %107 = vector.load %arg10[%c4_37, %c0_38] : memref<8x64xf32, #tpu.memory_space<vmem>>, vector<4x64xf32>
    tpu.vector_store %arg10[%c4_37, %c0_38], %106 {strides = array<i32>} : memref<8x64xf32, #tpu.memory_space<vmem>>, vector<4x64xf32>,
    %c0_39 = arith.constant 0 : index
    %c0_40 = arith.constant 0 : index
    %108 = vector.load %arg10[%c0_39, %c0_40] : memref<8x64xf32, #tpu.memory_space<vmem>>, vector<8x64xf32>
    %c1_41 = arith.constant 1 : index
    %c0_42 = arith.constant 0 : index
    %c0_43 = arith.constant 0 : index
    %109 = vector.load %arg2[%c1_41, %c0_42, %c0_43] : memref<4x64x256xf32, #tpu.memory_space<vmem>>, vector<1x64x256xf32>
    %110 = vector.shape_cast %109 : vector<1x64x256xf32> to vector<64x256xf32>
    %cst_44 = arith.constant dense<0.000000e+00> : vector<8x256xf32>
    %111 = tpu.matmul %108, %110, %cst_44 {dimension_numbers = #tpu.dot_dimension_numbers<[1], [0], [0], [1], [0, 0, 1, 1], [], []>} : vector<8x64xf32>, vector<64x256xf32>, vector<8x256xf32> -> vector<8x256xf32>
    %c2 = arith.constant 2 : index
    %c0_45 = arith.constant 0 : index
    %c0_46 = arith.constant 0 : index
    %112 = vector.load %arg4[%c2, %c0_45, %c0_46] : memref<5x1x256xf32, #tpu.memory_space<vmem>>, vector<1x1x256xf32>
    %113 = vector.shape_cast %112 : vector<1x1x256xf32> to vector<1x256xf32>
    %114 = vector.broadcast %113 : vector<1x256xf32> to vector<8x256xf32>
    %115 = arith.addf %111, %114 : vector<8x256xf32>
    %c2_47 = arith.constant 2 : index
    %c0_48 = arith.constant 0 : index
    %c0_49 = arith.constant 0 : index
    %116 = vector.load %arg3[%c2_47, %c0_48, %c0_49] : memref<5x64x256xf32, #tpu.memory_space<vmem>>, vector<1x64x256xf32>
    %117 = vector.shape_cast %116 : vector<1x64x256xf32> to vector<64x256xf32>
    %cst_50 = arith.constant 0.000000e+00 : f32
    %118 = vector.broadcast %cst_50 : f32 to vector<4x64xf32>
    %cst_51 = arith.constant 0.000000e+00 : f32
    %119 = vector.broadcast %cst_51 : f32 to vector<4x64xf32>
    %120 = vector.extract_strided_slice %115 {offsets = [0, 0], sizes = [4, 256], strides = [1, 1]} : vector<8x256xf32> to vector<4x256xf32>
    %cst_52 = arith.constant dense<0.000000e+00> : vector<4x256xf32>
    %121 = tpu.matmul %118, %117, %cst_52 {dimension_numbers = #tpu.dot_dimension_numbers<[1], [0], [0], [1], [0, 0, 1, 1], [], []>} : vector<4x64xf32>, vector<64x256xf32>, vector<4x256xf32> -> vector<4x256xf32>
    %122 = arith.addf %120, %121 : vector<4x256xf32>
    %123 = vector.extract_strided_slice %122 {offsets = [0, 0], sizes = [4, 192], strides = [1, 1]} : vector<4x256xf32> to vector<4x192xf32>
    %124 = arith.negf %123 : vector<4x192xf32>
    %125 = math.exp %124 : vector<4x192xf32>
    %cst_53 = arith.constant 1.000000e+00 : f32
    %126 = vector.broadcast %cst_53 : f32 to vector<4x192xf32>
    %127 = arith.addf %126, %125 : vector<4x192xf32>
    %128 = arith.divf %126, %127 : vector<4x192xf32>
    %129 = vector.extract_strided_slice %122 {offsets = [0, 192], sizes = [4, 64], strides = [1, 1]} : vector<4x256xf32> to vector<4x64xf32>
    %130 = math.tanh %129 : vector<4x64xf32>
    %131 = vector.extract_strided_slice %128 {offsets = [0, 0], sizes = [4, 64], strides = [1, 1]} : vector<4x192xf32> to vector<4x64xf32>
    %132 = vector.extract_strided_slice %128 {offsets = [0, 64], sizes = [4, 64], strides = [1, 1]} : vector<4x192xf32> to vector<4x64xf32>
    %133 = vector.extract_strided_slice %128 {offsets = [0, 128], sizes = [4, 64], strides = [1, 1]} : vector<4x192xf32> to vector<4x64xf32>
    %134 = arith.mulf %132, %119 : vector<4x64xf32>
    %135 = arith.mulf %131, %130 : vector<4x64xf32>
    %136 = arith.addf %134, %135 : vector<4x64xf32>
    %137 = math.tanh %136 : vector<4x64xf32>
    %138 = arith.mulf %133, %137 : vector<4x64xf32>
    %c0_54 = arith.constant 0 : index
    %c0_55 = arith.constant 0 : index
    %139 = vector.load %arg10[%c0_54, %c0_55] : memref<8x64xf32, #tpu.memory_space<vmem>>, vector<4x64xf32>
    tpu.vector_store %arg10[%c0_54, %c0_55], %138 {strides = array<i32>} : memref<8x64xf32, #tpu.memory_space<vmem>>, vector<4x64xf32>,
    %140 = vector.extract_strided_slice %115 {offsets = [4, 0], sizes = [4, 256], strides = [1, 1]} : vector<8x256xf32> to vector<4x256xf32>
    %cst_56 = arith.constant dense<0.000000e+00> : vector<4x256xf32>
    %141 = tpu.matmul %138, %117, %cst_56 {dimension_numbers = #tpu.dot_dimension_numbers<[1], [0], [0], [1], [0, 0, 1, 1], [], []>} : vector<4x64xf32>, vector<64x256xf32>, vector<4x256xf32> -> vector<4x256xf32>
    %142 = arith.addf %140, %141 : vector<4x256xf32>
    %143 = vector.extract_strided_slice %142 {offsets = [0, 0], sizes = [4, 192], strides = [1, 1]} : vector<4x256xf32> to vector<4x192xf32>
    %144 = arith.negf %143 : vector<4x192xf32>
    %145 = math.exp %144 : vector<4x192xf32>
    %cst_57 = arith.constant 1.000000e+00 : f32
    %146 = vector.broadcast %cst_57 : f32 to vector<4x192xf32>
    %147 = arith.addf %146, %145 : vector<4x192xf32>
    %148 = arith.divf %146, %147 : vector<4x192xf32>
    %149 = vector.extract_strided_slice %142 {offsets = [0, 192], sizes = [4, 64], strides = [1, 1]} : vector<4x256xf32> to vector<4x64xf32>
    %150 = math.tanh %149 : vector<4x64xf32>
    %151 = vector.extract_strided_slice %148 {offsets = [0, 0], sizes = [4, 64], strides = [1, 1]} : vector<4x192xf32> to vector<4x64xf32>
    %152 = vector.extract_strided_slice %148 {offsets = [0, 64], sizes = [4, 64], strides = [1, 1]} : vector<4x192xf32> to vector<4x64xf32>
    %153 = vector.extract_strided_slice %148 {offsets = [0, 128], sizes = [4, 64], strides = [1, 1]} : vector<4x192xf32> to vector<4x64xf32>
    %154 = arith.mulf %152, %136 : vector<4x64xf32>
    %155 = arith.mulf %151, %150 : vector<4x64xf32>
    %156 = arith.addf %154, %155 : vector<4x64xf32>
    %157 = math.tanh %156 : vector<4x64xf32>
    %158 = arith.mulf %153, %157 : vector<4x64xf32>
    %c4_58 = arith.constant 4 : index
    %c0_59 = arith.constant 0 : index
    %159 = vector.load %arg10[%c4_58, %c0_59] : memref<8x64xf32, #tpu.memory_space<vmem>>, vector<4x64xf32>
    tpu.vector_store %arg10[%c4_58, %c0_59], %158 {strides = array<i32>} : memref<8x64xf32, #tpu.memory_space<vmem>>, vector<4x64xf32>,
    %c0_60 = arith.constant 0 : index
    %c0_61 = arith.constant 0 : index
    %160 = vector.load %arg10[%c0_60, %c0_61] : memref<8x64xf32, #tpu.memory_space<vmem>>, vector<8x64xf32>
    %c2_62 = arith.constant 2 : index
    %c0_63 = arith.constant 0 : index
    %c0_64 = arith.constant 0 : index
    %161 = vector.load %arg2[%c2_62, %c0_63, %c0_64] : memref<4x64x256xf32, #tpu.memory_space<vmem>>, vector<1x64x256xf32>
    %162 = vector.shape_cast %161 : vector<1x64x256xf32> to vector<64x256xf32>
    %cst_65 = arith.constant dense<0.000000e+00> : vector<8x256xf32>
    %163 = tpu.matmul %160, %162, %cst_65 {dimension_numbers = #tpu.dot_dimension_numbers<[1], [0], [0], [1], [0, 0, 1, 1], [], []>} : vector<8x64xf32>, vector<64x256xf32>, vector<8x256xf32> -> vector<8x256xf32>
    %c3 = arith.constant 3 : index
    %c0_66 = arith.constant 0 : index
    %c0_67 = arith.constant 0 : index
    %164 = vector.load %arg4[%c3, %c0_66, %c0_67] : memref<5x1x256xf32, #tpu.memory_space<vmem>>, vector<1x1x256xf32>
    %165 = vector.shape_cast %164 : vector<1x1x256xf32> to vector<1x256xf32>
    %166 = vector.broadcast %165 : vector<1x256xf32> to vector<8x256xf32>
    %167 = arith.addf %163, %166 : vector<8x256xf32>
    %c3_68 = arith.constant 3 : index
    %c0_69 = arith.constant 0 : index
    %c0_70 = arith.constant 0 : index
    %168 = vector.load %arg3[%c3_68, %c0_69, %c0_70] : memref<5x64x256xf32, #tpu.memory_space<vmem>>, vector<1x64x256xf32>
    %169 = vector.shape_cast %168 : vector<1x64x256xf32> to vector<64x256xf32>
    %cst_71 = arith.constant 0.000000e+00 : f32
    %170 = vector.broadcast %cst_71 : f32 to vector<4x64xf32>
    %cst_72 = arith.constant 0.000000e+00 : f32
    %171 = vector.broadcast %cst_72 : f32 to vector<4x64xf32>
    %172 = vector.extract_strided_slice %167 {offsets = [0, 0], sizes = [4, 256], strides = [1, 1]} : vector<8x256xf32> to vector<4x256xf32>
    %cst_73 = arith.constant dense<0.000000e+00> : vector<4x256xf32>
    %173 = tpu.matmul %170, %169, %cst_73 {dimension_numbers = #tpu.dot_dimension_numbers<[1], [0], [0], [1], [0, 0, 1, 1], [], []>} : vector<4x64xf32>, vector<64x256xf32>, vector<4x256xf32> -> vector<4x256xf32>
    %174 = arith.addf %172, %173 : vector<4x256xf32>
    %175 = vector.extract_strided_slice %174 {offsets = [0, 0], sizes = [4, 192], strides = [1, 1]} : vector<4x256xf32> to vector<4x192xf32>
    %176 = arith.negf %175 : vector<4x192xf32>
    %177 = math.exp %176 : vector<4x192xf32>
    %cst_74 = arith.constant 1.000000e+00 : f32
    %178 = vector.broadcast %cst_74 : f32 to vector<4x192xf32>
    %179 = arith.addf %178, %177 : vector<4x192xf32>
    %180 = arith.divf %178, %179 : vector<4x192xf32>
    %181 = vector.extract_strided_slice %174 {offsets = [0, 192], sizes = [4, 64], strides = [1, 1]} : vector<4x256xf32> to vector<4x64xf32>
    %182 = math.tanh %181 : vector<4x64xf32>
    %183 = vector.extract_strided_slice %180 {offsets = [0, 0], sizes = [4, 64], strides = [1, 1]} : vector<4x192xf32> to vector<4x64xf32>
    %184 = vector.extract_strided_slice %180 {offsets = [0, 64], sizes = [4, 64], strides = [1, 1]} : vector<4x192xf32> to vector<4x64xf32>
    %185 = vector.extract_strided_slice %180 {offsets = [0, 128], sizes = [4, 64], strides = [1, 1]} : vector<4x192xf32> to vector<4x64xf32>
    %186 = arith.mulf %184, %171 : vector<4x64xf32>
    %187 = arith.mulf %183, %182 : vector<4x64xf32>
    %188 = arith.addf %186, %187 : vector<4x64xf32>
    %189 = math.tanh %188 : vector<4x64xf32>
    %190 = arith.mulf %185, %189 : vector<4x64xf32>
    %c0_75 = arith.constant 0 : index
    %c0_76 = arith.constant 0 : index
    %191 = vector.load %arg10[%c0_75, %c0_76] : memref<8x64xf32, #tpu.memory_space<vmem>>, vector<4x64xf32>
    tpu.vector_store %arg10[%c0_75, %c0_76], %190 {strides = array<i32>} : memref<8x64xf32, #tpu.memory_space<vmem>>, vector<4x64xf32>,
    %192 = vector.extract_strided_slice %167 {offsets = [4, 0], sizes = [4, 256], strides = [1, 1]} : vector<8x256xf32> to vector<4x256xf32>
    %cst_77 = arith.constant dense<0.000000e+00> : vector<4x256xf32>
    %193 = tpu.matmul %190, %169, %cst_77 {dimension_numbers = #tpu.dot_dimension_numbers<[1], [0], [0], [1], [0, 0, 1, 1], [], []>} : vector<4x64xf32>, vector<64x256xf32>, vector<4x256xf32> -> vector<4x256xf32>
    %194 = arith.addf %192, %193 : vector<4x256xf32>
    %195 = vector.extract_strided_slice %194 {offsets = [0, 0], sizes = [4, 192], strides = [1, 1]} : vector<4x256xf32> to vector<4x192xf32>
    %196 = arith.negf %195 : vector<4x192xf32>
    %197 = math.exp %196 : vector<4x192xf32>
    %cst_78 = arith.constant 1.000000e+00 : f32
    %198 = vector.broadcast %cst_78 : f32 to vector<4x192xf32>
    %199 = arith.addf %198, %197 : vector<4x192xf32>
    %200 = arith.divf %198, %199 : vector<4x192xf32>
    %201 = vector.extract_strided_slice %194 {offsets = [0, 192], sizes = [4, 64], strides = [1, 1]} : vector<4x256xf32> to vector<4x64xf32>
    %202 = math.tanh %201 : vector<4x64xf32>
    %203 = vector.extract_strided_slice %200 {offsets = [0, 0], sizes = [4, 64], strides = [1, 1]} : vector<4x192xf32> to vector<4x64xf32>
    %204 = vector.extract_strided_slice %200 {offsets = [0, 64], sizes = [4, 64], strides = [1, 1]} : vector<4x192xf32> to vector<4x64xf32>
    %205 = vector.extract_strided_slice %200 {offsets = [0, 128], sizes = [4, 64], strides = [1, 1]} : vector<4x192xf32> to vector<4x64xf32>
    %206 = arith.mulf %204, %188 : vector<4x64xf32>
    %207 = arith.mulf %203, %202 : vector<4x64xf32>
    %208 = arith.addf %206, %207 : vector<4x64xf32>
    %209 = math.tanh %208 : vector<4x64xf32>
    %210 = arith.mulf %205, %209 : vector<4x64xf32>
    %c4_79 = arith.constant 4 : index
    %c0_80 = arith.constant 0 : index
    %211 = vector.load %arg10[%c4_79, %c0_80] : memref<8x64xf32, #tpu.memory_space<vmem>>, vector<4x64xf32>
    tpu.vector_store %arg10[%c4_79, %c0_80], %210 {strides = array<i32>} : memref<8x64xf32, #tpu.memory_space<vmem>>, vector<4x64xf32>,
    %c0_81 = arith.constant 0 : index
    %c0_82 = arith.constant 0 : index
    %212 = vector.load %arg10[%c0_81, %c0_82] : memref<8x64xf32, #tpu.memory_space<vmem>>, vector<8x64xf32>
    %c3_83 = arith.constant 3 : index
    %c0_84 = arith.constant 0 : index
    %c0_85 = arith.constant 0 : index
    %213 = vector.load %arg2[%c3_83, %c0_84, %c0_85] : memref<4x64x256xf32, #tpu.memory_space<vmem>>, vector<1x64x256xf32>
    %214 = vector.shape_cast %213 : vector<1x64x256xf32> to vector<64x256xf32>
    %cst_86 = arith.constant dense<0.000000e+00> : vector<8x256xf32>
    %215 = tpu.matmul %212, %214, %cst_86 {dimension_numbers = #tpu.dot_dimension_numbers<[1], [0], [0], [1], [0, 0, 1, 1], [], []>} : vector<8x64xf32>, vector<64x256xf32>, vector<8x256xf32> -> vector<8x256xf32>
    %c4_87 = arith.constant 4 : index
    %c0_88 = arith.constant 0 : index
    %c0_89 = arith.constant 0 : index
    %216 = vector.load %arg4[%c4_87, %c0_88, %c0_89] : memref<5x1x256xf32, #tpu.memory_space<vmem>>, vector<1x1x256xf32>
    %217 = vector.shape_cast %216 : vector<1x1x256xf32> to vector<1x256xf32>
    %218 = vector.broadcast %217 : vector<1x256xf32> to vector<8x256xf32>
    %219 = arith.addf %215, %218 : vector<8x256xf32>
    %c4_90 = arith.constant 4 : index
    %c0_91 = arith.constant 0 : index
    %c0_92 = arith.constant 0 : index
    %220 = vector.load %arg3[%c4_90, %c0_91, %c0_92] : memref<5x64x256xf32, #tpu.memory_space<vmem>>, vector<1x64x256xf32>
    %221 = vector.shape_cast %220 : vector<1x64x256xf32> to vector<64x256xf32>
    %cst_93 = arith.constant 0.000000e+00 : f32
    %222 = vector.broadcast %cst_93 : f32 to vector<4x64xf32>
    %cst_94 = arith.constant 0.000000e+00 : f32
    %223 = vector.broadcast %cst_94 : f32 to vector<4x64xf32>
    %224 = vector.extract_strided_slice %219 {offsets = [0, 0], sizes = [4, 256], strides = [1, 1]} : vector<8x256xf32> to vector<4x256xf32>
    %cst_95 = arith.constant dense<0.000000e+00> : vector<4x256xf32>
    %225 = tpu.matmul %222, %221, %cst_95 {dimension_numbers = #tpu.dot_dimension_numbers<[1], [0], [0], [1], [0, 0, 1, 1], [], []>} : vector<4x64xf32>, vector<64x256xf32>, vector<4x256xf32> -> vector<4x256xf32>
    %226 = arith.addf %224, %225 : vector<4x256xf32>
    %227 = vector.extract_strided_slice %226 {offsets = [0, 0], sizes = [4, 192], strides = [1, 1]} : vector<4x256xf32> to vector<4x192xf32>
    %228 = arith.negf %227 : vector<4x192xf32>
    %229 = math.exp %228 : vector<4x192xf32>
    %cst_96 = arith.constant 1.000000e+00 : f32
    %230 = vector.broadcast %cst_96 : f32 to vector<4x192xf32>
    %231 = arith.addf %230, %229 : vector<4x192xf32>
    %232 = arith.divf %230, %231 : vector<4x192xf32>
    %233 = vector.extract_strided_slice %226 {offsets = [0, 192], sizes = [4, 64], strides = [1, 1]} : vector<4x256xf32> to vector<4x64xf32>
    %234 = math.tanh %233 : vector<4x64xf32>
    %235 = vector.extract_strided_slice %232 {offsets = [0, 0], sizes = [4, 64], strides = [1, 1]} : vector<4x192xf32> to vector<4x64xf32>
    %236 = vector.extract_strided_slice %232 {offsets = [0, 64], sizes = [4, 64], strides = [1, 1]} : vector<4x192xf32> to vector<4x64xf32>
    %237 = vector.extract_strided_slice %232 {offsets = [0, 128], sizes = [4, 64], strides = [1, 1]} : vector<4x192xf32> to vector<4x64xf32>
    %238 = arith.mulf %236, %223 : vector<4x64xf32>
    %239 = arith.mulf %235, %234 : vector<4x64xf32>
    %240 = arith.addf %238, %239 : vector<4x64xf32>
    %241 = math.tanh %240 : vector<4x64xf32>
    %242 = arith.mulf %237, %241 : vector<4x64xf32>
    %c0_97 = arith.constant 0 : index
    %c0_98 = arith.constant 0 : index
    %243 = vector.load %arg11[%c0_97, %c0_98] : memref<4x128xf32, #tpu.memory_space<vmem>>, vector<4x64xf32>
    tpu.vector_store %arg11[%c0_97, %c0_98], %242 {strides = array<i32>} : memref<4x128xf32, #tpu.memory_space<vmem>>, vector<4x64xf32>,
    %244 = vector.extract_strided_slice %219 {offsets = [4, 0], sizes = [4, 256], strides = [1, 1]} : vector<8x256xf32> to vector<4x256xf32>
    %cst_99 = arith.constant dense<0.000000e+00> : vector<4x256xf32>
    %245 = tpu.matmul %242, %221, %cst_99 {dimension_numbers = #tpu.dot_dimension_numbers<[1], [0], [0], [1], [0, 0, 1, 1], [], []>} : vector<4x64xf32>, vector<64x256xf32>, vector<4x256xf32> -> vector<4x256xf32>
    %246 = arith.addf %244, %245 : vector<4x256xf32>
    %247 = vector.extract_strided_slice %246 {offsets = [0, 0], sizes = [4, 192], strides = [1, 1]} : vector<4x256xf32> to vector<4x192xf32>
    %248 = arith.negf %247 : vector<4x192xf32>
    %249 = math.exp %248 : vector<4x192xf32>
    %cst_100 = arith.constant 1.000000e+00 : f32
    %250 = vector.broadcast %cst_100 : f32 to vector<4x192xf32>
    %251 = arith.addf %250, %249 : vector<4x192xf32>
    %252 = arith.divf %250, %251 : vector<4x192xf32>
    %253 = vector.extract_strided_slice %246 {offsets = [0, 192], sizes = [4, 64], strides = [1, 1]} : vector<4x256xf32> to vector<4x64xf32>
    %254 = math.tanh %253 : vector<4x64xf32>
    %255 = vector.extract_strided_slice %252 {offsets = [0, 0], sizes = [4, 64], strides = [1, 1]} : vector<4x192xf32> to vector<4x64xf32>
    %256 = vector.extract_strided_slice %252 {offsets = [0, 64], sizes = [4, 64], strides = [1, 1]} : vector<4x192xf32> to vector<4x64xf32>
    %257 = vector.extract_strided_slice %252 {offsets = [0, 128], sizes = [4, 64], strides = [1, 1]} : vector<4x192xf32> to vector<4x64xf32>
    %258 = arith.mulf %256, %240 : vector<4x64xf32>
    %259 = arith.mulf %255, %254 : vector<4x64xf32>
    %260 = arith.addf %258, %259 : vector<4x64xf32>
    %261 = math.tanh %260 : vector<4x64xf32>
    %262 = arith.mulf %257, %261 : vector<4x64xf32>
    %c0_101 = arith.constant 0 : index
    %c64 = arith.constant 64 : index
    %263 = vector.load %arg11[%c0_101, %c64] : memref<4x128xf32, #tpu.memory_space<vmem>>, vector<4x64xf32>
    tpu.vector_store %arg11[%c0_101, %c64], %262 {strides = array<i32>} : memref<4x128xf32, #tpu.memory_space<vmem>>, vector<4x64xf32>,
    %c0_102 = arith.constant 0 : index
    %c0_103 = arith.constant 0 : index
    %264 = vector.load %arg11[%c0_102, %c0_103] : memref<4x128xf32, #tpu.memory_space<vmem>>, vector<4x128xf32>
    %c0_104 = arith.constant 0 : index
    %c0_105 = arith.constant 0 : index
    %265 = vector.load %arg5[%c0_104, %c0_105] : memref<128x128xf32, #tpu.memory_space<vmem>>, vector<128x128xf32>
    %cst_106 = arith.constant dense<0.000000e+00> : vector<4x128xf32>
    %266 = tpu.matmul %264, %265, %cst_106 {dimension_numbers = #tpu.dot_dimension_numbers<[1], [0], [0], [1], [0, 0, 1, 1], [], []>} : vector<4x128xf32>, vector<128x128xf32>, vector<4x128xf32> -> vector<4x128xf32>
    %c0_107 = arith.constant 0 : index
    %c0_108 = arith.constant 0 : index
    %267 = vector.load %arg6[%c0_107, %c0_108] : memref<1x128xf32, #tpu.memory_space<vmem>>, vector<1x128xf32>
    %268 = vector.broadcast %267 : vector<1x128xf32> to vector<4x128xf32>
    %269 = arith.addf %266, %268 : vector<4x128xf32>
    %cst_109 = arith.constant 0.000000e+00 : f32
    %270 = vector.broadcast %cst_109 : f32 to vector<4x128xf32>
    %271 = arith.maximumf %269, %270 : vector<4x128xf32>
    %c0_110 = arith.constant 0 : index
    %c0_111 = arith.constant 0 : index
    %272 = vector.load %arg7[%c0_110, %c0_111] : memref<128x128xf32, #tpu.memory_space<vmem>>, vector<128x128xf32>
    %cst_112 = arith.constant dense<0.000000e+00> : vector<4x128xf32>
    %273 = tpu.matmul %271, %272, %cst_112 {dimension_numbers = #tpu.dot_dimension_numbers<[1], [0], [0], [1], [0, 0, 1, 1], [], []>} : vector<4x128xf32>, vector<128x128xf32>, vector<4x128xf32> -> vector<4x128xf32>
    %c0_113 = arith.constant 0 : index
    %c0_114 = arith.constant 0 : index
    %274 = vector.load %arg8[%c0_113, %c0_114] : memref<1x128xf32, #tpu.memory_space<vmem>>, vector<1x128xf32>
    %275 = vector.broadcast %274 : vector<1x128xf32> to vector<4x128xf32>
    %276 = arith.addf %273, %275 : vector<4x128xf32>
    %c0_115 = arith.constant 0 : index
    %c0_116 = arith.constant 0 : index
    %277 = vector.load %arg9[%c0_115, %c0_116] : memref<4x128xf32, #tpu.memory_space<vmem>>, vector<4x128xf32>
    tpu.vector_store %arg9[%c0_115, %c0_116], %276 {strides = array<i32>} : memref<4x128xf32, #tpu.memory_space<vmem>>, vector<4x128xf32>,
    return
  }
}

</mosaic_0001>

<llo_original>
// kernel: tpu_custom_call.1
$region0: #{tpu_custom_call.1}
  #allocation0 [shape = 'u32[]', space=smem, size = 0x4, offset = 0x4, fixed_abs, tag = 'smem constant byte address 0x4 - core index']
  #allocation1 [shape = 'u32[144,128]{1,0:T(1,128)}', space=vmem, size = 0x12000, scoped, tag = 'internal scratch']
  #allocation2 [shape = 'f32[8,64]{1,0:T(8,128)}', space=vmem, size = 0x1000, scoped, tag = 'scratch operand']
  #allocation3 [shape = 'f32[4,128]{1,0:T(4,128)}', space=vmem, size = 0x800, scoped, tag = 'scratch operand']
  %s0 = inlined_call_operand.vmem [shape: s32[8,1], index: 0, kind: input, shape index: {}]
  %s1 = inlined_call_operand.hbm [shape: f32[128,256], index: 1, kind: input, shape index: {}]
  %s2 = inlined_call_operand.hbm [shape: f32[4,64,256], index: 2, kind: input, shape index: {}]
  %s3 = inlined_call_operand.hbm [shape: f32[5,64,256], index: 3, kind: input, shape index: {}]
  %s4 = inlined_call_operand.vmem [shape: f32[5,1,256], index: 4, kind: input, shape index: {}]
  %s5 = inlined_call_operand.hbm [shape: f32[128,128], index: 5, kind: input, shape index: {}]
  %s6 = inlined_call_operand.vmem [shape: f32[1,128], index: 6, kind: input, shape index: {}]
  %s7 = inlined_call_operand.hbm [shape: f32[128,128], index: 7, kind: input, shape index: {}]
  %s8 = inlined_call_operand.vmem [shape: f32[1,128], index: 8, kind: input, shape index: {}]
  %s9 = inlined_call_operand.hbm [shape: f32[4,128], index: 9, kind: output, shape index: {}]
  %s10 = sld [smem:[#allocation0]]
  $region66: #{tpu_custom_call.1} parent=0
    _
  %s12 = ssub.s32 1, %s10
  %s13 = scalar_select 0, %s12, %s10
  $region1: #{tpu_custom_call.1} parent=0
    #allocation4 [shape = 'u8[131072]{0}', space=vmem, size = 0x20000, scoped, tag = 'input window, operand 1, single buffered']
    #allocation5 [shape = 's32[1]{0}', space=sflag, size = 0x4, scoped, tag = 'scoped memory for tpu_custom_call.1']
    #allocation6 [shape = 's32[1]{0}', space=sflag, size = 0x4, scoped, tag = 'scoped memory for tpu_custom_call.1']
    #allocation7 [shape = 'u8[262144]{0}', space=vmem, size = 0x40000, scoped, tag = 'input window, operand 2, single buffered']
    #allocation8 [shape = 's32[1]{0}', space=sflag, size = 0x4, scoped, tag = 'scoped memory for tpu_custom_call.1']
    #allocation9 [shape = 'u8[327680]{0}', space=vmem, size = 0x50000, scoped, tag = 'input window, operand 3, single buffered']
    #allocation10 [shape = 'u8[65536]{0}', space=vmem, size = 0x10000, scoped, tag = 'input window, operand 5, single buffered']
    #allocation11 [shape = 's32[1]{0}', space=sflag, size = 0x4, scoped, tag = 'scoped memory for tpu_custom_call.1']
    #allocation12 [shape = 'u8[65536]{0}', space=vmem, size = 0x10000, scoped, tag = 'input window, operand 7, single buffered']
    #allocation13 [shape = 'u8[2048]{0}', space=vmem, size = 0x800, scoped, tag = 'output window, operand 0, single buffered']
    %14 = vsyncpa [#allocation5], 0
    %15 = vsyncpa [#allocation8], 0
    %16 = vsyncpa [#allocation11], 0
    %17 = vsyncpa [#allocation6], 0
    // Predicated region
    $region2: #{tpu_custom_call.1} parent=1 // pred_check
      _
    $region3: #{tpu_custom_call.1} parent=1 // pred_check_branch
      %19 = sbr.rel (0) target = $region5
    $region4: #{tpu_custom_call.1} parent=1 // pred_region
      _
    $region5: #{tpu_custom_call.1} parent=1 // pred_fallthru
      _
    // Predicated region
    $region6: #{tpu_custom_call.1} parent=1 // pred_check
      _
    $region7: #{tpu_custom_call.1} parent=1 // pred_check_branch
      %21 = sbr.rel (0) target = $region9
    $region8: #{tpu_custom_call.1} parent=1 // pred_region
      %s23 = ssub.s32 4096, 4096
      %24 = vsyncadd [#allocation5], %s23
      %s25 = sshll.u32 [#allocation4], 4
      %s26 = int_to_ptr.vmem [resolvable:$true] %s25
      %31 = dma.hbm_to_vmem [thread:$0]  %s1, 4096, %s26, [#allocation5], 256, 256, 16
    $region9: #{tpu_custom_call.1} parent=1 // pred_fallthru
      _
    // Predicated region
    $region10: #{tpu_custom_call.1} parent=1 // pred_check
      _
    $region11: #{tpu_custom_call.1} parent=1 // pred_check_branch
      %33 = sbr.rel (0) target = $region13
    $region12: #{tpu_custom_call.1} parent=1 // pred_region
      %s35 = ssub.s32 8192, 8192
      %36 = vsyncadd [#allocation8], %s35
      %s37 = sshll.u32 [#allocation7], 4
      %s38 = int_to_ptr.vmem [resolvable:$true] %s37
      %43 = dma.hbm_to_vmem [thread:$0]  %s2, 8192, %s38, [#allocation8], 256, 256, 16
    $region13: #{tpu_custom_call.1} parent=1 // pred_fallthru
      _
    // Predicated region
    $region14: #{tpu_custom_call.1} parent=1 // pred_check
      _
    $region15: #{tpu_custom_call.1} parent=1 // pred_check_branch
      %45 = sbr.rel (0) target = $region17
    $region16: #{tpu_custom_call.1} parent=1 // pred_region
      %s47 = ssub.s32 10240, 10240
      %48 = vsyncadd [#allocation8], %s47
      %s49 = sshll.u32 [#allocation9], 4
      %s50 = int_to_ptr.vmem [resolvable:$true] %s49
      %55 = dma.hbm_to_vmem [thread:$0]  %s3, 10240, %s50, [#allocation8], 256, 256, 16
    $region17: #{tpu_custom_call.1} parent=1 // pred_fallthru
      _
    // Predicated region
    $region18: #{tpu_custom_call.1} parent=1 // pred_check
      _
    $region19: #{tpu_custom_call.1} parent=1 // pred_check_branch
      %57 = sbr.rel (0) target = $region21
    $region20: #{tpu_custom_call.1} parent=1 // pred_region
      _
    $region21: #{tpu_custom_call.1} parent=1 // pred_fallthru
      _
    // Predicated region
    $region22: #{tpu_custom_call.1} parent=1 // pred_check
      _
    $region23: #{tpu_custom_call.1} parent=1 // pred_check_branch
      %59 = sbr.rel (0) target = $region25
    $region24: #{tpu_custom_call.1} parent=1 // pred_region
      %s61 = ssub.s32 2048, 2048
      %62 = vsyncadd [#allocation11], %s61
      %s63 = sshll.u32 [#allocation10], 4
      %s64 = int_to_ptr.vmem [resolvable:$true] %s63
      %69 = dma.hbm_to_vmem [thread:$0]  %s5, 2048, %s64, [#allocation11], 128, 128, 8
    $region25: #{tpu_custom_call.1} parent=1 // pred_fallthru
      _
    // Predicated region
    $region26: #{tpu_custom_call.1} parent=1 // pred_check
      _
    $region27: #{tpu_custom_call.1} parent=1 // pred_check_branch
      %71 = sbr.rel (0) target = $region29
    $region28: #{tpu_custom_call.1} parent=1 // pred_region
      _
    $region29: #{tpu_custom_call.1} parent=1 // pred_fallthru
      _
    // Predicated region
    $region30: #{tpu_custom_call.1} parent=1 // pred_check
      _
    $region31: #{tpu_custom_call.1} parent=1 // pred_check_branch
      %73 = sbr.rel (0) target = $region33
    $region32: #{tpu_custom_call.1} parent=1 // pred_region
      %s75 = ssub.s32 2048, 2048
      %76 = vsyncadd [#allocation11], %s75
      %s77 = sshll.u32 [#allocation12], 4
      %s78 = int_to_ptr.vmem [resolvable:$true] %s77
      %83 = dma.hbm_to_vmem [thread:$0]  %s7, 2048, %s78, [#allocation11], 128, 128, 8
    $region33: #{tpu_custom_call.1} parent=1 // pred_fallthru
      _
    // Predicated region
    $region34: #{tpu_custom_call.1} parent=1 // pred_check
      _
    $region35: #{tpu_custom_call.1} parent=1 // pred_check_branch
      %85 = sbr.rel (0) target = $region37
    $region36: #{tpu_custom_call.1} parent=1 // pred_region
      _
    $region37: #{tpu_custom_call.1} parent=1 // pred_fallthru
      _
    // Predicated region
    $region38: #{tpu_custom_call.1} parent=1 // pred_check
      _
    $region39: #{tpu_custom_call.1} parent=1 // pred_check_branch
      %87 = sbr.rel (0) target = $region41
    $region40: #{tpu_custom_call.1} parent=1 // pred_region
      %88 = dma.done [#allocation5], 4096
    $region41: #{tpu_custom_call.1} parent=1 // pred_fallthru
      _
    // Predicated region
    $region42: #{tpu_custom_call.1} parent=1 // pred_check
      _
    $region43: #{tpu_custom_call.1} parent=1 // pred_check_branch
      %90 = sbr.rel (0) target = $region45
    $region44: #{tpu_custom_call.1} parent=1 // pred_region
      %91 = dma.done [#allocation8], 8192
    $region45: #{tpu_custom_call.1} parent=1 // pred_fallthru
      _
    // Predicated region
    $region46: #{tpu_custom_call.1} parent=1 // pred_check
      _
    $region47: #{tpu_custom_call.1} parent=1 // pred_check_branch
      %93 = sbr.rel (0) target = $region49
    $region48: #{tpu_custom_call.1} parent=1 // pred_region
      %94 = dma.done [#allocation8], 10240
    $region49: #{tpu_custom_call.1} parent=1 // pred_fallthru
      _
    // Predicated region
    $region50: #{tpu_custom_call.1} parent=1 // pred_check
      _
    $region51: #{tpu_custom_call.1} parent=1 // pred_check_branch
      %96 = sbr.rel (0) target = $region53
    $region52: #{tpu_custom_call.1} parent=1 // pred_region
      %97 = dma.done [#allocation11], 2048
    $region53: #{tpu_custom_call.1} parent=1 // pred_fallthru
      _
    // Predicated region
    $region54: #{tpu_custom_call.1} parent=1 // pred_check
      _
    $region55: #{tpu_custom_call.1} parent=1 // pred_check_branch
      %99 = sbr.rel (0) target = $region57
    $region56: #{tpu_custom_call.1} parent=1 // pred_region
      %100 = dma.done [#allocation11], 2048
    $region57: #{tpu_custom_call.1} parent=1 // pred_fallthru
      _
    %v101 = vlaneseq
    %v102 = vand.u32 %v101, 127
    %v103 = vld [vmem:[%s0] sm:$0xff]
    %104 = vset.pattern.permute.xlu0 0
    %105 = vperm.xlu0 %104, %v103
    %v106 = vpop.permute.xlu0 %105
    %vm107 = vcmp.eq.s32.totalorder %v102, %v106
    %v108 = vsel %vm107, 1, 0
    %v109 = vcvt.s32.f32 %v108
    %v110 = vld [vmem:[#allocation4] sm:$0xff]
    %v111 = vld [vmem:[#allocation4 + $0x8] sm:$0xff]
    %v112 = vld [vmem:[#allocation4 + $0x10] sm:$0xff]
    %v113 = vld [vmem:[#allocation4 + $0x18] sm:$0xff]
    %v114 = vld [vmem:[#allocation4 + $0x20] sm:$0xff]
    %v115 = vld [vmem:[#allocation4 + $0x28] sm:$0xff]
    %v116 = vld [vmem:[#allocation4 + $0x30] sm:$0xff]
    %v117 = vld [vmem:[#allocation4 + $0x38] sm:$0xff]
    %v118 = vld [vmem:[#allocation4 + $0x40] sm:$0xff]
    %v119 = vld [vmem:[#allocation4 + $0x48] sm:$0xff]
    %v120 = vld [vmem:[#allocation4 + $0x50] sm:$0xff]
    %v121 = vld [vmem:[#allocation4 + $0x58] sm:$0xff]
    %v122 = vld [vmem:[#allocation4 + $0x60] sm:$0xff]
    %v123 = vld [vmem:[#allocation4 + $0x68] sm:$0xff]
    %v124 = vld [vmem:[#allocation4 + $0x70] sm:$0xff]
    %v125 = vld [vmem:[#allocation4 + $0x78] sm:$0xff]
    %v126 = vld [vmem:[#allocation4 + $0x80] sm:$0xff]
    %v127 = vld [vmem:[#allocation4 + $0x88] sm:$0xff]
    %v128 = vld [vmem:[#allocation4 + $0x90] sm:$0xff]
    %v129 = vld [vmem:[#allocation4 + $0x98] sm:$0xff]
    %v130 = vld [vmem:[#allocation4 + $0xa0] sm:$0xff]
    %v131 = vld [vmem:[#allocation4 + $0xa8] sm:$0xff]
    %v132 = vld [vmem:[#allocation4 + $0xb0] sm:$0xff]
    %v133 = vld [vmem:[#allocation4 + $0xb8] sm:$0xff]
    %v134 = vld [vmem:[#allocation4 + $0xc0] sm:$0xff]
    %v135 = vld [vmem:[#allocation4 + $0xc8] sm:$0xff]
    %v136 = vld [vmem:[#allocation4 + $0xd0] sm:$0xff]
    %v137 = vld [vmem:[#allocation4 + $0xd8] sm:$0xff]
    %v138 = vld [vmem:[#allocation4 + $0xe0] sm:$0xff]
    %v139 = vld [vmem:[#allocation4 + $0xe8] sm:$0xff]
    %v140 = vld [vmem:[#allocation4 + $0xf0] sm:$0xff]
    %v141 = vld [vmem:[#allocation4 + $0xf8] sm:$0xff]
    %v142 = vld [vmem:[%s4] sm:$0x3]
    %v144 = vlaneseq
    %v145 = vshrl.u32 %v144, 7
    %v146 = vsub.s32 0, %v145
    %v147 = vrot.slane %v142, %v146
    %v148 = vlaneseq
    %v149 = vshrl.u32 %v148, 7
    %v150 = vsub.s32 1, %v149
    %v151 = vrot.slane %v142, %v150
    %154 = vmatprep.subr.mxu0 %v111
    %155 = vmatpush1.msra.mxu0 %v110
    %156 = vmatprep.subr.mxu0 %v113
    %157 = vmatpush1.msra.mxu0 %v112
    %158 = vmatprep.subr.mxu0 %v115
    %159 = vmatpush1.msra.mxu0 %v114
    %160 = vmatprep.subr.mxu0 %v117
    %161 = vmatpush1.msra.mxu0 %v116
    %162 = vmatprep.subr.mxu0 %v119
    %163 = vmatpush1.msra.mxu0 %v118
    %164 = vmatprep.subr.mxu0 %v121
    %165 = vmatpush1.msra.mxu0 %v120
    %166 = vmatprep.subr.mxu0 %v123
    %167 = vmatpush1.msra.mxu0 %v122
    %168 = vmatprep.subr.mxu0 %v125
    %169 = vmatpush1.msra.mxu0 %v124
    %170 = vmatprep.subr.mxu0 %v127
    %171 = vmatpush1.msra.mxu0 %v126
    %172 = vmatprep.subr.mxu0 %v129
    %173 = vmatpush1.msra.mxu0 %v128
    %174 = vmatprep.subr.mxu0 %v131
    %175 = vmatpush1.msra.mxu0 %v130
    %176 = vmatprep.subr.mxu0 %v133
    %177 = vmatpush1.msra.mxu0 %v132
    %178 = vmatprep.subr.mxu0 %v135
    %179 = vmatpush1.msra.mxu0 %v134
    %180 = vmatprep.subr.mxu0 %v137
    %181 = vmatpush1.msra.mxu0 %v136
    %182 = vmatprep.subr.mxu0 %v139
    %183 = vmatpush1.msra.mxu0 %v138
    %184 = vmatprep.subr.mxu0 %v141
    %185 = vmatpush1.msra.mxu0 %v140
    %186 = vmatprep.subr.mxu0 0.0
    %187 = vmatpush1.msra.mxu0 0.0
    %188 = vmatprep.subr.mxu0 0.0
    %189 = vmatpush1.msra.mxu0 0.0
    %190 = vmatprep.subr.mxu0 0.0
    %191 = vmatpush1.msra.mxu0 0.0
    %192 = vmatprep.subr.mxu0 0.0
    %193 = vmatpush1.msra.mxu0 0.0
    %194 = vmatprep.subr.mxu0 0.0
    %195 = vmatpush1.msra.mxu0 0.0
    %196 = vmatprep.subr.mxu0 0.0
    %197 = vmatpush1.msra.mxu0 0.0
    %198 = vmatprep.subr.mxu0 0.0
    %199 = vmatpush1.msra.mxu0 0.0
    %200 = vmatprep.subr.mxu0 0.0
    %201 = vmatpush1.msra.mxu0 0.0
    %202 = vmatprep.subr.mxu0 0.0
    %203 = vmatpush1.msra.mxu0 0.0
    %204 = vmatprep.subr.mxu0 0.0
    %205 = vmatpush1.msra.mxu0 0.0
    %206 = vmatprep.subr.mxu0 0.0
    %207 = vmatpush1.msra.mxu0 0.0
    %208 = vmatprep.subr.mxu0 0.0
    %209 = vmatpush1.msra.mxu0 0.0
    %210 = vmatprep.subr.mxu0 0.0
    %211 = vmatpush1.msra.mxu0 0.0
    %212 = vmatprep.subr.mxu0 0.0
    %213 = vmatpush1.msra.mxu0 0.0
    %214 = vmatprep.subr.mxu0 0.0
    %215 = vmatpush1.msra.mxu0 0.0
    %216 = vmatprep.subr.mxu0 0.0
    %217 = vmatpush1.msra.mxu0 0.0
    %218 = vmatprep.mubr.f32.mxu0 0.0
    %219 = vmatmul.mubr.f32.gmra.mrb[0].mxu0 %v109
    %v220 = vpop.f32.mrb[0].mxu0
    %v221 = vadd.f32 %v147, %v220
    %v222 = vpop.f32.mrb[0].mxu0
    %v223 = vadd.f32 %v151, %v222
    %224 = vdwg.mxu0
    %v225 = vld [vmem:[#allocation9] sm:$0xff]
    %v226 = vld [vmem:[#allocation9 + $0x8] sm:$0xff]
    %v227 = vld [vmem:[#allocation9 + $0x10] sm:$0xff]
    %v228 = vld [vmem:[#allocation9 + $0x18] sm:$0xff]
    %v229 = vld [vmem:[#allocation9 + $0x20] sm:$0xff]
    %v230 = vld [vmem:[#allocation9 + $0x28] sm:$0xff]
    %v231 = vld [vmem:[#allocation9 + $0x30] sm:$0xff]
    %v232 = vld [vmem:[#allocation9 + $0x38] sm:$0xff]
    %v233 = vld [vmem:[#allocation9 + $0x40] sm:$0xff]
    %v234 = vld [vmem:[#allocation9 + $0x48] sm:$0xff]
    %v235 = vld [vmem:[#allocation9 + $0x50] sm:$0xff]
    %v236 = vld [vmem:[#allocation9 + $0x58] sm:$0xff]
    %v237 = vld [vmem:[#allocation9 + $0x60] sm:$0xff]
    %v238 = vld [vmem:[#allocation9 + $0x68] sm:$0xff]
    %v239 = vld [vmem:[#allocation9 + $0x70] sm:$0xff]
    %v240 = vld [vmem:[#allocation9 + $0x78] sm:$0xff]
    %vm241 = vcmask 523264
    %v243 = vsel %vm241, 0.0, 0
    %245 = vmatprep.subr.mxu0 %v226
    %246 = vmatpush1.msra.mxu0 %v225
    %247 = vmatprep.subr.mxu0 %v228
    %248 = vmatpush1.msra.mxu0 %v227
    %249 = vmatprep.subr.mxu0 %v230
    %250 = vmatpush1.msra.mxu0 %v229
    %251 = vmatprep.subr.mxu0 %v232
    %252 = vmatpush1.msra.mxu0 %v231
    %253 = vmatprep.subr.mxu0 %v234
    %254 = vmatpush1.msra.mxu0 %v233
    %255 = vmatprep.subr.mxu0 %v236
    %256 = vmatpush1.msra.mxu0 %v235
    %257 = vmatprep.subr.mxu0 %v238
    %258 = vmatpush1.msra.mxu0 %v237
    %259 = vmatprep.subr.mxu0 %v240
    %260 = vmatpush1.msra.mxu0 %v239
    %261 = vmatprep.subr.mxu0 0.0
    %262 = vmatpush1.msra.mxu0 0.0
    %263 = vmatprep.subr.mxu0 0.0
    %264 = vmatpush1.msra.mxu0 0.0
    %265 = vmatprep.subr.mxu0 0.0
    %266 = vmatpush1.msra.mxu0 0.0
    %267 = vmatprep.subr.mxu0 0.0
    %268 = vmatpush1.msra.mxu0 0.0
    %269 = vmatprep.subr.mxu0 0.0
    %270 = vmatpush1.msra.mxu0 0.0
    %271 = vmatprep.subr.mxu0 0.0
    %272 = vmatpush1.msra.mxu0 0.0
    %273 = vmatprep.subr.mxu0 0.0
    %274 = vmatpush1.msra.mxu0 0.0
    %275 = vmatprep.subr.mxu0 0.0
    %276 = vmatpush1.msra.mxu0 0.0
    %277 = vmatprep.subr.mxu0 0.0
    %278 = vmatpush1.msra.mxu0 0.0
    %279 = vmatprep.subr.mxu0 0.0
    %280 = vmatpush1.msra.mxu0 0.0
    %281 = vmatprep.subr.mxu0 0.0
    %282 = vmatpush1.msra.mxu0 0.0
    %283 = vmatprep.subr.mxu0 0.0
    %284 = vmatpush1.msra.mxu0 0.0
    %285 = vmatprep.subr.mxu0 0.0
    %286 = vmatpush1.msra.mxu0 0.0
    %287 = vmatprep.subr.mxu0 0.0
    %288 = vmatpush1.msra.mxu0 0.0
    %289 = vmatprep.subr.mxu0 0.0
    %290 = vmatpush1.msra.mxu0 0.0
    %291 = vmatprep.subr.mxu0 0.0
    %292 = vmatpush1.msra.mxu0 0.0
    %293 = vmatprep.subr.mxu0 0.0
    %294 = vmatpush1.msra.mxu0 0.0
    %295 = vmatprep.subr.mxu0 0.0
    %296 = vmatpush1.msra.mxu0 0.0
    %297 = vmatprep.subr.mxu0 0.0
    %298 = vmatpush1.msra.mxu0 0.0
    %299 = vmatprep.subr.mxu0 0.0
    %300 = vmatpush1.msra.mxu0 0.0
    %301 = vmatprep.subr.mxu0 0.0
    %302 = vmatpush1.msra.mxu0 0.0
    %303 = vmatprep.subr.mxu0 0.0
    %304 = vmatpush1.msra.mxu0 0.0
    %305 = vmatprep.subr.mxu0 0.0
    %306 = vmatpush1.msra.mxu0 0.0
    %307 = vmatprep.subr.mxu0 0.0
    %308 = vmatpush1.msra.mxu0 0.0
    %309 = vmatprep.mubr.f32.mxu0 0.0
    %310 = vmatmul.mubr.f32.gmra.mrb[0].mxu0 %v243
    %v311 = vpop.f32.mrb[0].mxu0
    %v312 = vadd.f32 0.0, %v311
    %v313 = vpop.f32.mrb[0].mxu0
    %v314 = vadd.f32 0.0, %v313
    %315 = vdwg.mxu0
    %v316 = vadd.f32 %v221, %v312
    %v317 = vadd.f32 %v223, %v314
    %v318 = vxor.u32 %v316, 2147483648
    %v319 = vxor.u32 %v317, 2147483648
    %v320 = vmul.f32 %v318, 1.442695
    %v321 = vpow.pop %v320
    %v322 = vmul.f32 %v319, 1.442695
    %v323 = vpow.pop %v322
    %v324 = vadd.f32 %v321, 1.0
    %v325 = vadd.f32 %v323, 1.0
    %v326 = vrcp.pop %v324
    %v327 = vmul.f32 1.0, %v326
    %v328 = vrcp.pop %v325
    %v329 = vmul.f32 1.0, %v328
    %v330 = vtanh.pop %v317
    %v331 = vmul.f32 %v327, 0.0
    %333 = vrot.lane.b32.xlu0 %v330, 64
    %v334 = vpop.permute.xlu0 %333
    %v336 = vmul.f32 %v327, %v334
    %338 = vrot.lane.b32.xlu0 %v336, 64
    %v339 = vpop.permute.xlu0 %338
    %v341 = vadd.f32 %v331, %v339
    %v342 = vtanh.pop %v341
    %344 = vrot.lane.b32.xlu0 %v342, 64
    %v345 = vpop.permute.xlu0 %344
    %v347 = vmul.f32 %v329, %v345
    %vm348 = vcmask 519168
    %349 = vst.msk [vmem:[#allocation2] sm:$0xf] %vm348, %v347
    %v351 = vsel %vm241, %v347, 0
    %353 = vmatprep.subr.mxu0 %v226
    %354 = vmatpush1.msra.mxu0 %v225
    %355 = vmatprep.subr.mxu0 %v228
    %356 = vmatpush1.msra.mxu0 %v227
    %357 = vmatprep.subr.mxu0 %v230
    %358 = vmatpush1.msra.mxu0 %v229
    %359 = vmatprep.subr.mxu0 %v232
    %360 = vmatpush1.msra.mxu0 %v231
    %361 = vmatprep.subr.mxu0 %v234
    %362 = vmatpush1.msra.mxu0 %v233
    %363 = vmatprep.subr.mxu0 %v236
    %364 = vmatpush1.msra.mxu0 %v235
    %365 = vmatprep.subr.mxu0 %v238
    %366 = vmatpush1.msra.mxu0 %v237
    %367 = vmatprep.subr.mxu0 %v240
    %368 = vmatpush1.msra.mxu0 %v239
    %369 = vmatprep.subr.mxu0 0.0
    %370 = vmatpush1.msra.mxu0 0.0
    %371 = vmatprep.subr.mxu0 0.0
    %372 = vmatpush1.msra.mxu0 0.0
    %373 = vmatprep.subr.mxu0 0.0
    %374 = vmatpush1.msra.mxu0 0.0
    %375 = vmatprep.subr.mxu0 0.0
    %376 = vmatpush1.msra.mxu0 0.0
    %377 = vmatprep.subr.mxu0 0.0
    %378 = vmatpush1.msra.mxu0 0.0
    %379 = vmatprep.subr.mxu0 0.0
    %380 = vmatpush1.msra.mxu0 0.0
    %381 = vmatprep.subr.mxu0 0.0
    %382 = vmatpush1.msra.mxu0 0.0
    %383 = vmatprep.subr.mxu0 0.0
    %384 = vmatpush1.msra.mxu0 0.0
    %385 = vmatprep.subr.mxu0 0.0
    %386 = vmatpush1.msra.mxu0 0.0
    %387 = vmatprep.subr.mxu0 0.0
    %388 = vmatpush1.msra.mxu0 0.0
    %389 = vmatprep.subr.mxu0 0.0
    %390 = vmatpush1.msra.mxu0 0.0
    %391 = vmatprep.subr.mxu0 0.0
    %392 = vmatpush1.msra.mxu0 0.0
    %393 = vmatprep.subr.mxu0 0.0
    %394 = vmatpush1.msra.mxu0 0.0
    %395 = vmatprep.subr.mxu0 0.0
    %396 = vmatpush1.msra.mxu0 0.0
    %397 = vmatprep.subr.mxu0 0.0
    %398 = vmatpush1.msra.mxu0 0.0
    %399 = vmatprep.subr.mxu0 0.0
    %400 = vmatpush1.msra.mxu0 0.0
    %401 = vmatprep.subr.mxu0 0.0
    %402 = vmatpush1.msra.mxu0 0.0
    %403 = vmatprep.subr.mxu0 0.0
    %404 = vmatpush1.msra.mxu0 0.0
    %405 = vmatprep.subr.mxu0 0.0
    %406 = vmatpush1.msra.mxu0 0.0
    %407 = vmatprep.subr.mxu0 0.0
    %408 = vmatpush1.msra.mxu0 0.0
    %409 = vmatprep.subr.mxu0 0.0
    %410 = vmatpush1.msra.mxu0 0.0
    %411 = vmatprep.subr.mxu0 0.0
    %412 = vmatpush1.msra.mxu0 0.0
    %413 = vmatprep.subr.mxu0 0.0
    %414 = vmatpush1.msra.mxu0 0.0
    %415 = vmatprep.subr.mxu0 0.0
    %416 = vmatpush1.msra.mxu0 0.0
    %417 = vmatprep.mubr.f32.mxu0 0.0
    %418 = vmatmul.mubr.f32.gmra.mrb[0].mxu0 %v351
    %v419 = vpop.f32.mrb[0].mxu0
    %v420 = vadd.f32 0.0, %v419
    %v421 = vpop.f32.mrb[0].mxu0
    %v422 = vadd.f32 0.0, %v421
    %423 = vdwg.mxu0
    %v426 = vrot.slane %v420, 4
    %v427 = vrot.slane %v422, 4
    %v430 = vadd.f32 %v221, %v426
    %v431 = vadd.f32 %v223, %v427
    %v432 = vxor.u32 %v430, 2147483648
    %v433 = vxor.u32 %v431, 2147483648
    %v434 = vmul.f32 %v432, 1.442695
    %v435 = vpow.pop %v434
    %v436 = vmul.f32 %v433, 1.442695
    %v437 = vpow.pop %v436
    %v438 = vadd.f32 %v435, 1.0
    %v439 = vadd.f32 %v437, 1.0
    %v440 = vrcp.pop %v438
    %v441 = vmul.f32 1.0, %v440
    %v442 = vrcp.pop %v439
    %v443 = vmul.f32 1.0, %v442
    %v444 = vtanh.pop %v431
    %v446 = vrot.slane %v341, 4
    %v448 = vmul.f32 %v441, %v446
    %450 = vrot.lane.b32.xlu0 %v444, 64
    %v451 = vpop.permute.xlu0 %450
    %v453 = vmul.f32 %v441, %v451
    %455 = vrot.lane.b32.xlu0 %v453, 64
    %v456 = vpop.permute.xlu0 %455
    %v458 = vadd.f32 %v448, %v456
    %v459 = vtanh.pop %v458
    %461 = vrot.lane.b32.xlu0 %v459, 64
    %v462 = vpop.permute.xlu0 %461
    %v464 = vmul.f32 %v443, %v462
    %vm465 = vcmask 523268
    %466 = vst.msk [vmem:[#allocation2] sm:$0xf0] %vm465, %v464
    %v467 = vld [vmem:[#allocation2] sm:$0xff]
    %v468 = vld [vmem:[#allocation7] sm:$0xff]
    %v469 = vld [vmem:[#allocation7 + $0x8] sm:$0xff]
    %v470 = vld [vmem:[#allocation7 + $0x10] sm:$0xff]
    %v471 = vld [vmem:[#allocation7 + $0x18] sm:$0xff]
    %v472 = vld [vmem:[#allocation7 + $0x20] sm:$0xff]
    %v473 = vld [vmem:[#allocation7 + $0x28] sm:$0xff]
    %v474 = vld [vmem:[#allocation7 + $0x30] sm:$0xff]
    %v475 = vld [vmem:[#allocation7 + $0x38] sm:$0xff]
    %v476 = vld [vmem:[#allocation7 + $0x40] sm:$0xff]
    %v477 = vld [vmem:[#allocation7 + $0x48] sm:$0xff]
    %v478 = vld [vmem:[#allocation7 + $0x50] sm:$0xff]
    %v479 = vld [vmem:[#allocation7 + $0x58] sm:$0xff]
    %v480 = vld [vmem:[#allocation7 + $0x60] sm:$0xff]
    %v481 = vld [vmem:[#allocation7 + $0x68] sm:$0xff]
    %v482 = vld [vmem:[#allocation7 + $0x70] sm:$0xff]
    %v483 = vld [vmem:[#allocation7 + $0x78] sm:$0xff]
    %s484 = scalar_lea.vmem %s4, 2
    %v485 = vld [vmem:[%s484] sm:$0x3]
    %v487 = vlaneseq
    %v488 = vshrl.u32 %v487, 7
    %v489 = vsub.s32 0, %v488
    %v490 = vrot.slane %v485, %v489
    %v491 = vlaneseq
    %v492 = vshrl.u32 %v491, 7
    %v493 = vsub.s32 1, %v492
    %v494 = vrot.slane %v485, %v493
    %v498 = vsel %vm241, %v467, 0
    %500 = vmatprep.subr.mxu0 %v469
    %501 = vmatpush1.msra.mxu0 %v468
    %502 = vmatprep.subr.mxu0 %v471
    %503 = vmatpush1.msra.mxu0 %v470
    %504 = vmatprep.subr.mxu0 %v473
    %505 = vmatpush1.msra.mxu0 %v472
    %506 = vmatprep.subr.mxu0 %v475
    %507 = vmatpush1.msra.mxu0 %v474
    %508 = vmatprep.subr.mxu0 %v477
    %509 = vmatpush1.msra.mxu0 %v476
    %510 = vmatprep.subr.mxu0 %v479
    %511 = vmatpush1.msra.mxu0 %v478
    %512 = vmatprep.subr.mxu0 %v481
    %513 = vmatpush1.msra.mxu0 %v480
    %514 = vmatprep.subr.mxu0 %v483
    %515 = vmatpush1.msra.mxu0 %v482
    %516 = vmatprep.subr.mxu0 0.0
    %517 = vmatpush1.msra.mxu0 0.0
    %518 = vmatprep.subr.mxu0 0.0
    %519 = vmatpush1.msra.mxu0 0.0
    %520 = vmatprep.subr.mxu0 0.0
    %521 = vmatpush1.msra.mxu0 0.0
    %522 = vmatprep.subr.mxu0 0.0
    %523 = vmatpush1.msra.mxu0 0.0
    %524 = vmatprep.subr.mxu0 0.0
    %525 = vmatpush1.msra.mxu0 0.0
    %526 = vmatprep.subr.mxu0 0.0
    %527 = vmatpush1.msra.mxu0 0.0
    %528 = vmatprep.subr.mxu0 0.0
    %529 = vmatpush1.msra.mxu0 0.0
    %530 = vmatprep.subr.mxu0 0.0
    %531 = vmatpush1.msra.mxu0 0.0
    %532 = vmatprep.subr.mxu0 0.0
    %533 = vmatpush1.msra.mxu0 0.0
    %534 = vmatprep.subr.mxu0 0.0
    %535 = vmatpush1.msra.mxu0 0.0
    %536 = vmatprep.subr.mxu0 0.0
    %537 = vmatpush1.msra.mxu0 0.0
    %538 = vmatprep.subr.mxu0 0.0
    %539 = vmatpush1.msra.mxu0 0.0
    %540 = vmatprep.subr.mxu0 0.0
    %541 = vmatpush1.msra.mxu0 0.0
    %542 = vmatprep.subr.mxu0 0.0
    %543 = vmatpush1.msra.mxu0 0.0
    %544 = vmatprep.subr.mxu0 0.0
    %545 = vmatpush1.msra.mxu0 0.0
    %546 = vmatprep.subr.mxu0 0.0
    %547 = vmatpush1.msra.mxu0 0.0
    %548 = vmatprep.subr.mxu0 0.0
    %549 = vmatpush1.msra.mxu0 0.0
    %550 = vmatprep.subr.mxu0 0.0
    %551 = vmatpush1.msra.mxu0 0.0
    %552 = vmatprep.subr.mxu0 0.0
    %553 = vmatpush1.msra.mxu0 0.0
    %554 = vmatprep.subr.mxu0 0.0
    %555 = vmatpush1.msra.mxu0 0.0
    %556 = vmatprep.subr.mxu0 0.0
    %557 = vmatpush1.msra.mxu0 0.0
    %558 = vmatprep.subr.mxu0 0.0
    %559 = vmatpush1.msra.mxu0 0.0
    %560 = vmatprep.subr.mxu0 0.0
    %561 = vmatpush1.msra.mxu0 0.0
    %562 = vmatprep.subr.mxu0 0.0
    %563 = vmatpush1.msra.mxu0 0.0
    %564 = vmatprep.mubr.f32.mxu0 0.0
    %565 = vmatmul.mubr.f32.gmra.mrb[0].mxu0 %v498
    %v566 = vpop.f32.mrb[0].mxu0
    %v567 = vadd.f32 %v490, %v566
    %v568 = vpop.f32.mrb[0].mxu0
    %v569 = vadd.f32 %v494, %v568
    %570 = vdwg.mxu0
    %s571 = scalar_lea.vmem [#allocation9], 128
    %v572 = vld [vmem:[%s571] sm:$0xff]
    %v573 = vld [vmem:[%s571 + $0x8] sm:$0xff]
    %v574 = vld [vmem:[%s571 + $0x10] sm:$0xff]
    %v575 = vld [vmem:[%s571 + $0x18] sm:$0xff]
    %v576 = vld [vmem:[%s571 + $0x20] sm:$0xff]
    %v577 = vld [vmem:[%s571 + $0x28] sm:$0xff]
    %v578 = vld [vmem:[%s571 + $0x30] sm:$0xff]
    %v579 = vld [vmem:[%s571 + $0x38] sm:$0xff]
    %v580 = vld [vmem:[%s571 + $0x40] sm:$0xff]
    %v581 = vld [vmem:[%s571 + $0x48] sm:$0xff]
    %v582 = vld [vmem:[%s571 + $0x50] sm:$0xff]
    %v583 = vld [vmem:[%s571 + $0x58] sm:$0xff]
    %v584 = vld [vmem:[%s571 + $0x60] sm:$0xff]
    %v585 = vld [vmem:[%s571 + $0x68] sm:$0xff]
    %v586 = vld [vmem:[%s571 + $0x70] sm:$0xff]
    %v587 = vld [vmem:[%s571 + $0x78] sm:$0xff]
    %588 = vmatprep.subr.mxu0 %v573
    %589 = vmatpush1.msra.mxu0 %v572
    %590 = vmatprep.subr.mxu0 %v575
    %591 = vmatpush1.msra.mxu0 %v574
    %592 = vmatprep.subr.mxu0 %v577
    %593 = vmatpush1.msra.mxu0 %v576
    %594 = vmatprep.subr.mxu0 %v579
    %595 = vmatpush1.msra.mxu0 %v578
    %596 = vmatprep.subr.mxu0 %v581
    %597 = vmatpush1.msra.mxu0 %v580
    %598 = vmatprep.subr.mxu0 %v583
    %599 = vmatpush1.msra.mxu0 %v582
    %600 = vmatprep.subr.mxu0 %v585
    %601 = vmatpush1.msra.mxu0 %v584
    %602 = vmatprep.subr.mxu0 %v587
    %603 = vmatpush1.msra.mxu0 %v586
    %604 = vmatprep.subr.mxu0 0.0
    %605 = vmatpush1.msra.mxu0 0.0
    %606 = vmatprep.subr.mxu0 0.0
    %607 = vmatpush1.msra.mxu0 0.0
    %608 = vmatprep.subr.mxu0 0.0
    %609 = vmatpush1.msra.mxu0 0.0
    %610 = vmatprep.subr.mxu0 0.0
    %611 = vmatpush1.msra.mxu0 0.0
    %612 = vmatprep.subr.mxu0 0.0
    %613 = vmatpush1.msra.mxu0 0.0
    %614 = vmatprep.subr.mxu0 0.0
    %615 = vmatpush1.msra.mxu0 0.0
    %616 = vmatprep.subr.mxu0 0.0
    %617 = vmatpush1.msra.mxu0 0.0
    %618 = vmatprep.subr.mxu0 0.0
    %619 = vmatpush1.msra.mxu0 0.0
    %620 = vmatprep.subr.mxu0 0.0
    %621 = vmatpush1.msra.mxu0 0.0
    %622 = vmatprep.subr.mxu0 0.0
    %623 = vmatpush1.msra.mxu0 0.0
    %624 = vmatprep.subr.mxu0 0.0
    %625 = vmatpush1.msra.mxu0 0.0
    %626 = vmatprep.subr.mxu0 0.0
    %627 = vmatpush1.msra.mxu0 0.0
    %628 = vmatprep.subr.mxu0 0.0
    %629 = vmatpush1.msra.mxu0 0.0
    %630 = vmatprep.subr.mxu0 0.0
    %631 = vmatpush1.msra.mxu0 0.0
    %632 = vmatprep.subr.mxu0 0.0
    %633 = vmatpush1.msra.mxu0 0.0
    %634 = vmatprep.subr.mxu0 0.0
    %635 = vmatpush1.msra.mxu0 0.0
    %636 = vmatprep.subr.mxu0 0.0
    %637 = vmatpush1.msra.mxu0 0.0
    %638 = vmatprep.subr.mxu0 0.0
    %639 = vmatpush1.msra.mxu0 0.0
    %640 = vmatprep.subr.mxu0 0.0
    %641 = vmatpush1.msra.mxu0 0.0
    %642 = vmatprep.subr.mxu0 0.0
    %643 = vmatpush1.msra.mxu0 0.0
    %644 = vmatprep.subr.mxu0 0.0
    %645 = vmatpush1.msra.mxu0 0.0
    %646 = vmatprep.subr.mxu0 0.0
    %647 = vmatpush1.msra.mxu0 0.0
    %648 = vmatprep.subr.mxu0 0.0
    %649 = vmatpush1.msra.mxu0 0.0
    %650 = vmatprep.subr.mxu0 0.0
    %651 = vmatpush1.msra.mxu0 0.0
    %652 = vmatprep.mubr.f32.mxu0 0.0
    %653 = vmatmul.mubr.f32.gmra.mrb[0].mxu0 %v243
    %v654 = vpop.f32.mrb[0].mxu0
    %v655 = vadd.f32 0.0, %v654
    %v656 = vpop.f32.mrb[0].mxu0
    %v657 = vadd.f32 0.0, %v656
    %658 = vdwg.mxu0
    %v659 = vadd.f32 %v567, %v655
    %v660 = vadd.f32 %v569, %v657
    %v661 = vxor.u32 %v659, 2147483648
    %v662 = vxor.u32 %v660, 2147483648
    %v663 = vmul.f32 %v661, 1.442695
    %v664 = vpow.pop %v663
    %v665 = vmul.f32 %v662, 1.442695
    %v666 = vpow.pop %v665
    %v667 = vadd.f32 %v664, 1.0
    %v668 = vadd.f32 %v666, 1.0
    %v669 = vrcp.pop %v667
    %v670 = vmul.f32 1.0, %v669
    %v671 = vrcp.pop %v668
    %v672 = vmul.f32 1.0, %v671
    %v673 = vtanh.pop %v660
    %v674 = vmul.f32 %v670, 0.0
    %676 = vrot.lane.b32.xlu0 %v673, 64
    %v677 = vpop.permute.xlu0 %676
    %v679 = vmul.f32 %v670, %v677
    %681 = vrot.lane.b32.xlu0 %v679, 64
    %v682 = vpop.permute.xlu0 %681
    %v684 = vadd.f32 %v674, %v682
    %v685 = vtanh.pop %v684
    %687 = vrot.lane.b32.xlu0 %v685, 64
    %v688 = vpop.permute.xlu0 %687
    %v690 = vmul.f32 %v672, %v688
    %691 = vst.msk [vmem:[#allocation2] sm:$0xf] %vm348, %v690
    %v693 = vsel %vm241, %v690, 0
    %695 = vmatprep.subr.mxu0 %v573
    %696 = vmatpush1.msra.mxu0 %v572
    %697 = vmatprep.subr.mxu0 %v575
    %698 = vmatpush1.msra.mxu0 %v574
    %699 = vmatprep.subr.mxu0 %v577
    %700 = vmatpush1.msra.mxu0 %v576
    %701 = vmatprep.subr.mxu0 %v579
    %702 = vmatpush1.msra.mxu0 %v578
    %703 = vmatprep.subr.mxu0 %v581
    %704 = vmatpush1.msra.mxu0 %v580
    %705 = vmatprep.subr.mxu0 %v583
    %706 = vmatpush1.msra.mxu0 %v582
    %707 = vmatprep.subr.mxu0 %v585
    %708 = vmatpush1.msra.mxu0 %v584
    %709 = vmatprep.subr.mxu0 %v587
    %710 = vmatpush1.msra.mxu0 %v586
    %711 = vmatprep.subr.mxu0 0.0
    %712 = vmatpush1.msra.mxu0 0.0
    %713 = vmatprep.subr.mxu0 0.0
    %714 = vmatpush1.msra.mxu0 0.0
    %715 = vmatprep.subr.mxu0 0.0
    %716 = vmatpush1.msra.mxu0 0.0
    %717 = vmatprep.subr.mxu0 0.0
    %718 = vmatpush1.msra.mxu0 0.0
    %719 = vmatprep.subr.mxu0 0.0
    %720 = vmatpush1.msra.mxu0 0.0
    %721 = vmatprep.subr.mxu0 0.0
    %722 = vmatpush1.msra.mxu0 0.0
    %723 = vmatprep.subr.mxu0 0.0
    %724 = vmatpush1.msra.mxu0 0.0
    %725 = vmatprep.subr.mxu0 0.0
    %726 = vmatpush1.msra.mxu0 0.0
    %727 = vmatprep.subr.mxu0 0.0
    %728 = vmatpush1.msra.mxu0 0.0
    %729 = vmatprep.subr.mxu0 0.0
    %730 = vmatpush1.msra.mxu0 0.0
    %731 = vmatprep.subr.mxu0 0.0
    %732 = vmatpush1.msra.mxu0 0.0
    %733 = vmatprep.subr.mxu0 0.0
    %734 = vmatpush1.msra.mxu0 0.0
    %735 = vmatprep.subr.mxu0 0.0
    %736 = vmatpush1.msra.mxu0 0.0
    %737 = vmatprep.subr.mxu0 0.0
    %738 = vmatpush1.msra.mxu0 0.0
    %739 = vmatprep.subr.mxu0 0.0
    %740 = vmatpush1.msra.mxu0 0.0
    %741 = vmatprep.subr.mxu0 0.0
    %742 = vmatpush1.msra.mxu0 0.0
    %743 = vmatprep.subr.mxu0 0.0
    %744 = vmatpush1.msra.mxu0 0.0
    %745 = vmatprep.subr.mxu0 0.0
    %746 = vmatpush1.msra.mxu0 0.0
    %747 = vmatprep.subr.mxu0 0.0
    %748 = vmatpush1.msra.mxu0 0.0
    %749 = vmatprep.subr.mxu0 0.0
    %750 = vmatpush1.msra.mxu0 0.0
    %751 = vmatprep.subr.mxu0 0.0
    %752 = vmatpush1.msra.mxu0 0.0
    %753 = vmatprep.subr.mxu0 0.0
    %754 = vmatpush1.msra.mxu0 0.0
    %755 = vmatprep.subr.mxu0 0.0
    %756 = vmatpush1.msra.mxu0 0.0
    %757 = vmatprep.subr.mxu0 0.0
    %758 = vmatpush1.msra.mxu0 0.0
    %759 = vmatprep.mubr.f32.mxu0 0.0
    %760 = vmatmul.mubr.f32.gmra.mrb[0].mxu0 %v693
    %v761 = vpop.f32.mrb[0].mxu0
    %v762 = vadd.f32 0.0, %v761
    %v763 = vpop.f32.mrb[0].mxu0
    %v764 = vadd.f32 0.0, %v763
    %765 = vdwg.mxu0
    %v768 = vrot.slane %v762, 4
    %v769 = vrot.slane %v764, 4
    %v772 = vadd.f32 %v567, %v768
    %v773 = vadd.f32 %v569, %v769
    %v774 = vxor.u32 %v772, 2147483648
    %v775 = vxor.u32 %v773, 2147483648
    %v776 = vmul.f32 %v774, 1.442695
    %v777 = vpow.pop %v776
    %v778 = vmul.f32 %v775, 1.442695
    %v779 = vpow.pop %v778
    %v780 = vadd.f32 %v777, 1.0
    %v781 = vadd.f32 %v779, 1.0
    %v782 = vrcp.pop %v780
    %v783 = vmul.f32 1.0, %v782
    %v784 = vrcp.pop %v781
    %v785 = vmul.f32 1.0, %v784
    %v786 = vtanh.pop %v773
    %v788 = vrot.slane %v684, 4
    %v790 = vmul.f32 %v783, %v788
    %792 = vrot.lane.b32.xlu0 %v786, 64
    %v793 = vpop.permute.xlu0 %792
    %v795 = vmul.f32 %v783, %v793
    %797 = vrot.lane.b32.xlu0 %v795, 64
    %v798 = vpop.permute.xlu0 %797
    %v800 = vadd.f32 %v790, %v798
    %v801 = vtanh.pop %v800
    %803 = vrot.lane.b32.xlu0 %v801, 64
    %v804 = vpop.permute.xlu0 %803
    %v806 = vmul.f32 %v785, %v804
    %807 = vst.msk [vmem:[#allocation2] sm:$0xf0] %vm465, %v806
    %v808 = vld [vmem:[#allocation2] sm:$0xff]
    %s809 = scalar_lea.vmem [#allocation7], 128
    %v810 = vld [vmem:[%s809] sm:$0xff]
    %v811 = vld [vmem:[%s809 + $0x8] sm:$0xff]
    %v812 = vld [vmem:[%s809 + $0x10] sm:$0xff]
    %v813 = vld [vmem:[%s809 + $0x18] sm:$0xff]
    %v814 = vld [vmem:[%s809 + $0x20] sm:$0xff]
    %v815 = vld [vmem:[%s809 + $0x28] sm:$0xff]
    %v816 = vld [vmem:[%s809 + $0x30] sm:$0xff]
    %v817 = vld [vmem:[%s809 + $0x38] sm:$0xff]
    %v818 = vld [vmem:[%s809 + $0x40] sm:$0xff]
    %v819 = vld [vmem:[%s809 + $0x48] sm:$0xff]
    %v820 = vld [vmem:[%s809 + $0x50] sm:$0xff]
    %v821 = vld [vmem:[%s809 + $0x58] sm:$0xff]
    %v822 = vld [vmem:[%s809 + $0x60] sm:$0xff]
    %v823 = vld [vmem:[%s809 + $0x68] sm:$0xff]
    %v824 = vld [vmem:[%s809 + $0x70] sm:$0xff]
    %v825 = vld [vmem:[%s809 + $0x78] sm:$0xff]
    %s826 = scalar_lea.vmem %s4, 4
    %v827 = vld [vmem:[%s826] sm:$0x3]
    %v829 = vlaneseq
    %v830 = vshrl.u32 %v829, 7
    %v831 = vsub.s32 0, %v830
    %v832 = vrot.slane %v827, %v831
    %v833 = vlaneseq
    %v834 = vshrl.u32 %v833, 7
    %v835 = vsub.s32 1, %v834
    %v836 = vrot.slane %v827, %v835
    %v840 = vsel %vm241, %v808, 0
    %842 = vmatprep.subr.mxu0 %v811
    %843 = vmatpush1.msra.mxu0 %v810
    %844 = vmatprep.subr.mxu0 %v813
    %845 = vmatpush1.msra.mxu0 %v812
    %846 = vmatprep.subr.mxu0 %v815
    %847 = vmatpush1.msra.mxu0 %v814
    %848 = vmatprep.subr.mxu0 %v817
    %849 = vmatpush1.msra.mxu0 %v816
    %850 = vmatprep.subr.mxu0 %v819
    %851 = vmatpush1.msra.mxu0 %v818
    %852 = vmatprep.subr.mxu0 %v821
    %853 = vmatpush1.msra.mxu0 %v820
    %854 = vmatprep.subr.mxu0 %v823
    %855 = vmatpush1.msra.mxu0 %v822
    %856 = vmatprep.subr.mxu0 %v825
    %857 = vmatpush1.msra.mxu0 %v824
    %858 = vmatprep.subr.mxu0 0.0
    %859 = vmatpush1.msra.mxu0 0.0
    %860 = vmatprep.subr.mxu0 0.0
    %861 = vmatpush1.msra.mxu0 0.0
    %862 = vmatprep.subr.mxu0 0.0
    %863 = vmatpush1.msra.mxu0 0.0
    %864 = vmatprep.subr.mxu0 0.0
    %865 = vmatpush1.msra.mxu0 0.0
    %866 = vmatprep.subr.mxu0 0.0
    %867 = vmatpush1.msra.mxu0 0.0
    %868 = vmatprep.subr.mxu0 0.0
    %869 = vmatpush1.msra.mxu0 0.0
    %870 = vmatprep.subr.mxu0 0.0
    %871 = vmatpush1.msra.mxu0 0.0
    %872 = vmatprep.subr.mxu0 0.0
    %873 = vmatpush1.msra.mxu0 0.0
    %874 = vmatprep.subr.mxu0 0.0
    %875 = vmatpush1.msra.mxu0 0.0
    %876 = vmatprep.subr.mxu0 0.0
    %877 = vmatpush1.msra.mxu0 0.0
    %878 = vmatprep.subr.mxu0 0.0
    %879 = vmatpush1.msra.mxu0 0.0
    %880 = vmatprep.subr.mxu0 0.0
    %881 = vmatpush1.msra.mxu0 0.0
    %882 = vmatprep.subr.mxu0 0.0
    %883 = vmatpush1.msra.mxu0 0.0
    %884 = vmatprep.subr.mxu0 0.0
    %885 = vmatpush1.msra.mxu0 0.0
    %886 = vmatprep.subr.mxu0 0.0
    %887 = vmatpush1.msra.mxu0 0.0
    %888 = vmatprep.subr.mxu0 0.0
    %889 = vmatpush1.msra.mxu0 0.0
    %890 = vmatprep.subr.mxu0 0.0
    %891 = vmatpush1.msra.mxu0 0.0
    %892 = vmatprep.subr.mxu0 0.0
    %893 = vmatpush1.msra.mxu0 0.0
    %894 = vmatprep.subr.mxu0 0.0
    %895 = vmatpush1.msra.mxu0 0.0
    %896 = vmatprep.subr.mxu0 0.0
    %897 = vmatpush1.msra.mxu0 0.0
    %898 = vmatprep.subr.mxu0 0.0
    %899 = vmatpush1.msra.mxu0 0.0
    %900 = vmatprep.subr.mxu0 0.0
    %901 = vmatpush1.msra.mxu0 0.0
    %902 = vmatprep.subr.mxu0 0.0
    %903 = vmatpush1.msra.mxu0 0.0
    %904 = vmatprep.subr.mxu0 0.0
    %905 = vmatpush1.msra.mxu0 0.0
    %906 = vmatprep.mubr.f32.mxu0 0.0
    %907 = vmatmul.mubr.f32.gmra.mrb[0].mxu0 %v840
    %v908 = vpop.f32.mrb[0].mxu0
    %v909 = vadd.f32 %v832, %v908
    %v910 = vpop.f32.mrb[0].mxu0
    %v911 = vadd.f32 %v836, %v910
    %912 = vdwg.mxu0
    %s913 = scalar_lea.vmem [#allocation9], 256
    %v914 = vld [vmem:[%s913] sm:$0xff]
    %v915 = vld [vmem:[%s913 + $0x8] sm:$0xff]
    %v916 = vld [vmem:[%s913 + $0x10] sm:$0xff]
    %v917 = vld [vmem:[%s913 + $0x18] sm:$0xff]
    %v918 = vld [vmem:[%s913 + $0x20] sm:$0xff]
    %v919 = vld [vmem:[%s913 + $0x28] sm:$0xff]
    %v920 = vld [vmem:[%s913 + $0x30] sm:$0xff]
    %v921 = vld [vmem:[%s913 + $0x38] sm:$0xff]
    %v922 = vld [vmem:[%s913 + $0x40] sm:$0xff]
    %v923 = vld [vmem:[%s913 + $0x48] sm:$0xff]
    %v924 = vld [vmem:[%s913 + $0x50] sm:$0xff]
    %v925 = vld [vmem:[%s913 + $0x58] sm:$0xff]
    %v926 = vld [vmem:[%s913 + $0x60] sm:$0xff]
    %v927 = vld [vmem:[%s913 + $0x68] sm:$0xff]
    %v928 = vld [vmem:[%s913 + $0x70] sm:$0xff]
    %v929 = vld [vmem:[%s913 + $0x78] sm:$0xff]
    %930 = vmatprep.subr.mxu0 %v915
    %931 = vmatpush1.msra.mxu0 %v914
    %932 = vmatprep.subr.mxu0 %v917
    %933 = vmatpush1.msra.mxu0 %v916
    %934 = vmatprep.subr.mxu0 %v919
    %935 = vmatpush1.msra.mxu0 %v918
    %936 = vmatprep.subr.mxu0 %v921
    %937 = vmatpush1.msra.mxu0 %v920
    %938 = vmatprep.subr.mxu0 %v923
    %939 = vmatpush1.msra.mxu0 %v922
    %940 = vmatprep.subr.mxu0 %v925
    %941 = vmatpush1.msra.mxu0 %v924
    %942 = vmatprep.subr.mxu0 %v927
    %943 = vmatpush1.msra.mxu0 %v926
    %944 = vmatprep.subr.mxu0 %v929
    %945 = vmatpush1.msra.mxu0 %v928
    %946 = vmatprep.subr.mxu0 0.0
    %947 = vmatpush1.msra.mxu0 0.0
    %948 = vmatprep.subr.mxu0 0.0
    %949 = vmatpush1.msra.mxu0 0.0
    %950 = vmatprep.subr.mxu0 0.0
    %951 = vmatpush1.msra.mxu0 0.0
    %952 = vmatprep.subr.mxu0 0.0
    %953 = vmatpush1.msra.mxu0 0.0
    %954 = vmatprep.subr.mxu0 0.0
    %955 = vmatpush1.msra.mxu0 0.0
    %956 = vmatprep.subr.mxu0 0.0
    %957 = vmatpush1.msra.mxu0 0.0
    %958 = vmatprep.subr.mxu0 0.0
    %959 = vmatpush1.msra.mxu0 0.0
    %960 = vmatprep.subr.mxu0 0.0
    %961 = vmatpush1.msra.mxu0 0.0
    %962 = vmatprep.subr.mxu0 0.0
    %963 = vmatpush1.msra.mxu0 0.0
    %964 = vmatprep.subr.mxu0 0.0
    %965 = vmatpush1.msra.mxu0 0.0
    %966 = vmatprep.subr.mxu0 0.0
    %967 = vmatpush1.msra.mxu0 0.0
    %968 = vmatprep.subr.mxu0 0.0
    %969 = vmatpush1.msra.mxu0 0.0
    %970 = vmatprep.subr.mxu0 0.0
    %971 = vmatpush1.msra.mxu0 0.0
    %972 = vmatprep.subr.mxu0 0.0
    %973 = vmatpush1.msra.mxu0 0.0
    %974 = vmatprep.subr.mxu0 0.0
    %975 = vmatpush1.msra.mxu0 0.0
    %976 = vmatprep.subr.mxu0 0.0
    %977 = vmatpush1.msra.mxu0 0.0
    %978 = vmatprep.subr.mxu0 0.0
    %979 = vmatpush1.msra.mxu0 0.0
    %980 = vmatprep.subr.mxu0 0.0
    %981 = vmatpush1.msra.mxu0 0.0
    %982 = vmatprep.subr.mxu0 0.0
    %983 = vmatpush1.msra.mxu0 0.0
    %984 = vmatprep.subr.mxu0 0.0
    %985 = vmatpush1.msra.mxu0 0.0
    %986 = vmatprep.subr.mxu0 0.0
    %987 = vmatpush1.msra.mxu0 0.0
    %988 = vmatprep.subr.mxu0 0.0
    %989 = vmatpush1.msra.mxu0 0.0
    %990 = vmatprep.subr.mxu0 0.0
    %991 = vmatpush1.msra.mxu0 0.0
    %992 = vmatprep.subr.mxu0 0.0
    %993 = vmatpush1.msra.mxu0 0.0
    %994 = vmatprep.mubr.f32.mxu0 0.0
    %995 = vmatmul.mubr.f32.gmra.mrb[0].mxu0 %v243
    %v996 = vpop.f32.mrb[0].mxu0
    %v997 = vadd.f32 0.0, %v996
    %v998 = vpop.f32.mrb[0].mxu0
    %v999 = vadd.f32 0.0, %v998
    %1000 = vdwg.mxu0
    %v1001 = vadd.f32 %v909, %v997
    %v1002 = vadd.f32 %v911, %v999
    %v1003 = vxor.u32 %v1001, 2147483648
    %v1004 = vxor.u32 %v1002, 2147483648
    %v1005 = vmul.f32 %v1003, 1.442695
    %v1006 = vpow.pop %v1005
    %v1007 = vmul.f32 %v1004, 1.442695
    %v1008 = vpow.pop %v1007
    %v1009 = vadd.f32 %v1006, 1.0
    %v1010 = vadd.f32 %v1008, 1.0
    %v1011 = vrcp.pop %v1009
    %v1012 = vmul.f32 1.0, %v1011
    %v1013 = vrcp.pop %v1010
    %v1014 = vmul.f32 1.0, %v1013
    %v1015 = vtanh.pop %v1002
    %v1016 = vmul.f32 %v1012, 0.0
    %1018 = vrot.lane.b32.xlu0 %v1015, 64
    %v1019 = vpop.permute.xlu0 %1018
    %v1021 = vmul.f32 %v1012, %v1019
    %1023 = vrot.lane.b32.xlu0 %v1021, 64
    %v1024 = vpop.permute.xlu0 %1023
    %v1026 = vadd.f32 %v1016, %v1024
    %v1027 = vtanh.pop %v1026
    %1029 = vrot.lane.b32.xlu0 %v1027, 64
    %v1030 = vpop.permute.xlu0 %1029
    %v1032 = vmul.f32 %v1014, %v1030
    %1033 = vst.msk [vmem:[#allocation2] sm:$0xf] %vm348, %v1032
    %v1035 = vsel %vm241, %v1032, 0
    %1037 = vmatprep.subr.mxu0 %v915
    %1038 = vmatpush1.msra.mxu0 %v914
    %1039 = vmatprep.subr.mxu0 %v917
    %1040 = vmatpush1.msra.mxu0 %v916
    %1041 = vmatprep.subr.mxu0 %v919
    %1042 = vmatpush1.msra.mxu0 %v918
    %1043 = vmatprep.subr.mxu0 %v921
    %1044 = vmatpush1.msra.mxu0 %v920
    %1045 = vmatprep.subr.mxu0 %v923
    %1046 = vmatpush1.msra.mxu0 %v922
    %1047 = vmatprep.subr.mxu0 %v925
    %1048 = vmatpush1.msra.mxu0 %v924
    %1049 = vmatprep.subr.mxu0 %v927
    %1050 = vmatpush1.msra.mxu0 %v926
    %1051 = vmatprep.subr.mxu0 %v929
    %1052 = vmatpush1.msra.mxu0 %v928
    %1053 = vmatprep.subr.mxu0 0.0
    %1054 = vmatpush1.msra.mxu0 0.0
    %1055 = vmatprep.subr.mxu0 0.0
    %1056 = vmatpush1.msra.mxu0 0.0
    %1057 = vmatprep.subr.mxu0 0.0
    %1058 = vmatpush1.msra.mxu0 0.0
    %1059 = vmatprep.subr.mxu0 0.0
    %1060 = vmatpush1.msra.mxu0 0.0
    %1061 = vmatprep.subr.mxu0 0.0
    %1062 = vmatpush1.msra.mxu0 0.0
    %1063 = vmatprep.subr.mxu0 0.0
    %1064 = vmatpush1.msra.mxu0 0.0
    %1065 = vmatprep.subr.mxu0 0.0
    %1066 = vmatpush1.msra.mxu0 0.0
    %1067 = vmatprep.subr.mxu0 0.0
    %1068 = vmatpush1.msra.mxu0 0.0
    %1069 = vmatprep.subr.mxu0 0.0
    %1070 = vmatpush1.msra.mxu0 0.0
    %1071 = vmatprep.subr.mxu0 0.0
    %1072 = vmatpush1.msra.mxu0 0.0
    %1073 = vmatprep.subr.mxu0 0.0
    %1074 = vmatpush1.msra.mxu0 0.0
    %1075 = vmatprep.subr.mxu0 0.0
    %1076 = vmatpush1.msra.mxu0 0.0
    %1077 = vmatprep.subr.mxu0 0.0
    %1078 = vmatpush1.msra.mxu0 0.0
    %1079 = vmatprep.subr.mxu0 0.0
    %1080 = vmatpush1.msra.mxu0 0.0
    %1081 = vmatprep.subr.mxu0 0.0
    %1082 = vmatpush1.msra.mxu0 0.0
    %1083 = vmatprep.subr.mxu0 0.0
    %1084 = vmatpush1.msra.mxu0 0.0
    %1085 = vmatprep.subr.mxu0 0.0
    %1086 = vmatpush1.msra.mxu0 0.0
    %1087 = vmatprep.subr.mxu0 0.0
    %1088 = vmatpush1.msra.mxu0 0.0
    %1089 = vmatprep.subr.mxu0 0.0
    %1090 = vmatpush1.msra.mxu0 0.0
    %1091 = vmatprep.subr.mxu0 0.0
    %1092 = vmatpush1.msra.mxu0 0.0
    %1093 = vmatprep.subr.mxu0 0.0
    %1094 = vmatpush1.msra.mxu0 0.0
    %1095 = vmatprep.subr.mxu0 0.0
    %1096 = vmatpush1.msra.mxu0 0.0
    %1097 = vmatprep.subr.mxu0 0.0
    %1098 = vmatpush1.msra.mxu0 0.0
    %1099 = vmatprep.subr.mxu0 0.0
    %1100 = vmatpush1.msra.mxu0 0.0
    %1101 = vmatprep.mubr.f32.mxu0 0.0
    %1102 = vmatmul.mubr.f32.gmra.mrb[0].mxu0 %v1035
    %v1103 = vpop.f32.mrb[0].mxu0
    %v1104 = vadd.f32 0.0, %v1103
    %v1105 = vpop.f32.mrb[0].mxu0
    %v1106 = vadd.f32 0.0, %v1105
    %1107 = vdwg.mxu0
    %v1110 = vrot.slane %v1104, 4
    %v1111 = vrot.slane %v1106, 4
    %v1114 = vadd.f32 %v909, %v1110
    %v1115 = vadd.f32 %v911, %v1111
    %v1116 = vxor.u32 %v1114, 2147483648
    %v1117 = vxor.u32 %v1115, 2147483648
    %v1118 = vmul.f32 %v1116, 1.442695
    %v1119 = vpow.pop %v1118
    %v1120 = vmul.f32 %v1117, 1.442695
    %v1121 = vpow.pop %v1120
    %v1122 = vadd.f32 %v1119, 1.0
    %v1123 = vadd.f32 %v1121, 1.0
    %v1124 = vrcp.pop %v1122
    %v1125 = vmul.f32 1.0, %v1124
    %v1126 = vrcp.pop %v1123
    %v1127 = vmul.f32 1.0, %v1126
    %v1128 = vtanh.pop %v1115
    %v1130 = vrot.slane %v1026, 4
    %v1132 = vmul.f32 %v1125, %v1130
    %1134 = vrot.lane.b32.xlu0 %v1128, 64
    %v1135 = vpop.permute.xlu0 %1134
    %v1137 = vmul.f32 %v1125, %v1135
    %1139 = vrot.lane.b32.xlu0 %v1137, 64
    %v1140 = vpop.permute.xlu0 %1139
    %v1142 = vadd.f32 %v1132, %v1140
    %v1143 = vtanh.pop %v1142
    %1145 = vrot.lane.b32.xlu0 %v1143, 64
    %v1146 = vpop.permute.xlu0 %1145
    %v1148 = vmul.f32 %v1127, %v1146
    %1149 = vst.msk [vmem:[#allocation2] sm:$0xf0] %vm465, %v1148
    %v1150 = vld [vmem:[#allocation2] sm:$0xff]
    %s1151 = scalar_lea.vmem [#allocation7], 256
    %v1152 = vld [vmem:[%s1151] sm:$0xff]
    %v1153 = vld [vmem:[%s1151 + $0x8] sm:$0xff]
    %v1154 = vld [vmem:[%s1151 + $0x10] sm:$0xff]
    %v1155 = vld [vmem:[%s1151 + $0x18] sm:$0xff]
    %v1156 = vld [vmem:[%s1151 + $0x20] sm:$0xff]
    %v1157 = vld [vmem:[%s1151 + $0x28] sm:$0xff]
    %v1158 = vld [vmem:[%s1151 + $0x30] sm:$0xff]
    %v1159 = vld [vmem:[%s1151 + $0x38] sm:$0xff]
    %v1160 = vld [vmem:[%s1151 + $0x40] sm:$0xff]
    %v1161 = vld [vmem:[%s1151 + $0x48] sm:$0xff]
    %v1162 = vld [vmem:[%s1151 + $0x50] sm:$0xff]
    %v1163 = vld [vmem:[%s1151 + $0x58] sm:$0xff]
    %v1164 = vld [vmem:[%s1151 + $0x60] sm:$0xff]
    %v1165 = vld [vmem:[%s1151 + $0x68] sm:$0xff]
    %v1166 = vld [vmem:[%s1151 + $0x70] sm:$0xff]
    %v1167 = vld [vmem:[%s1151 + $0x78] sm:$0xff]
    %s1168 = scalar_lea.vmem %s4, 6
    %v1169 = vld [vmem:[%s1168] sm:$0x3]
    %v1171 = vlaneseq
    %v1172 = vshrl.u32 %v1171, 7
    %v1173 = vsub.s32 0, %v1172
    %v1174 = vrot.slane %v1169, %v1173
    %v1175 = vlaneseq
    %v1176 = vshrl.u32 %v1175, 7
    %v1177 = vsub.s32 1, %v1176
    %v1178 = vrot.slane %v1169, %v1177
    %v1182 = vsel %vm241, %v1150, 0
    %1184 = vmatprep.subr.mxu0 %v1153
    %1185 = vmatpush1.msra.mxu0 %v1152
    %1186 = vmatprep.subr.mxu0 %v1155
    %1187 = vmatpush1.msra.mxu0 %v1154
    %1188 = vmatprep.subr.mxu0 %v1157
    %1189 = vmatpush1.msra.mxu0 %v1156
    %1190 = vmatprep.subr.mxu0 %v1159
    %1191 = vmatpush1.msra.mxu0 %v1158
    %1192 = vmatprep.subr.mxu0 %v1161
    %1193 = vmatpush1.msra.mxu0 %v1160
    %1194 = vmatprep.subr.mxu0 %v1163
    %1195 = vmatpush1.msra.mxu0 %v1162
    %1196 = vmatprep.subr.mxu0 %v1165
    %1197 = vmatpush1.msra.mxu0 %v1164
    %1198 = vmatprep.subr.mxu0 %v1167
    %1199 = vmatpush1.msra.mxu0 %v1166
    %1200 = vmatprep.subr.mxu0 0.0
    %1201 = vmatpush1.msra.mxu0 0.0
    %1202 = vmatprep.subr.mxu0 0.0
    %1203 = vmatpush1.msra.mxu0 0.0
    %1204 = vmatprep.subr.mxu0 0.0
    %1205 = vmatpush1.msra.mxu0 0.0
    %1206 = vmatprep.subr.mxu0 0.0
    %1207 = vmatpush1.msra.mxu0 0.0
    %1208 = vmatprep.subr.mxu0 0.0
    %1209 = vmatpush1.msra.mxu0 0.0
    %1210 = vmatprep.subr.mxu0 0.0
    %1211 = vmatpush1.msra.mxu0 0.0
    %1212 = vmatprep.subr.mxu0 0.0
    %1213 = vmatpush1.msra.mxu0 0.0
    %1214 = vmatprep.subr.mxu0 0.0
    %1215 = vmatpush1.msra.mxu0 0.0
    %1216 = vmatprep.subr.mxu0 0.0
    %1217 = vmatpush1.msra.mxu0 0.0
    %1218 = vmatprep.subr.mxu0 0.0
    %1219 = vmatpush1.msra.mxu0 0.0
    %1220 = vmatprep.subr.mxu0 0.0
    %1221 = vmatpush1.msra.mxu0 0.0
    %1222 = vmatprep.subr.mxu0 0.0
    %1223 = vmatpush1.msra.mxu0 0.0
    %1224 = vmatprep.subr.mxu0 0.0
    %1225 = vmatpush1.msra.mxu0 0.0
    %1226 = vmatprep.subr.mxu0 0.0
    %1227 = vmatpush1.msra.mxu0 0.0
    %1228 = vmatprep.subr.mxu0 0.0
    %1229 = vmatpush1.msra.mxu0 0.0
    %1230 = vmatprep.subr.mxu0 0.0
    %1231 = vmatpush1.msra.mxu0 0.0
    %1232 = vmatprep.subr.mxu0 0.0
    %1233 = vmatpush1.msra.mxu0 0.0
    %1234 = vmatprep.subr.mxu0 0.0
    %1235 = vmatpush1.msra.mxu0 0.0
    %1236 = vmatprep.subr.mxu0 0.0
    %1237 = vmatpush1.msra.mxu0 0.0
    %1238 = vmatprep.subr.mxu0 0.0
    %1239 = vmatpush1.msra.mxu0 0.0
    %1240 = vmatprep.subr.mxu0 0.0
    %1241 = vmatpush1.msra.mxu0 0.0
    %1242 = vmatprep.subr.mxu0 0.0
    %1243 = vmatpush1.msra.mxu0 0.0
    %1244 = vmatprep.subr.mxu0 0.0
    %1245 = vmatpush1.msra.mxu0 0.0
    %1246 = vmatprep.subr.mxu0 0.0
    %1247 = vmatpush1.msra.mxu0 0.0
    %1248 = vmatprep.mubr.f32.mxu0 0.0
    %1249 = vmatmul.mubr.f32.gmra.mrb[0].mxu0 %v1182
    %v1250 = vpop.f32.mrb[0].mxu0
    %v1251 = vadd.f32 %v1174, %v1250
    %v1252 = vpop.f32.mrb[0].mxu0
    %v1253 = vadd.f32 %v1178, %v1252
    %1254 = vdwg.mxu0
    %s1255 = scalar_lea.vmem [#allocation9], 384
    %v1256 = vld [vmem:[%s1255] sm:$0xff]
    %v1257 = vld [vmem:[%s1255 + $0x8] sm:$0xff]
    %v1258 = vld [vmem:[%s1255 + $0x10] sm:$0xff]
    %v1259 = vld [vmem:[%s1255 + $0x18] sm:$0xff]
    %v1260 = vld [vmem:[%s1255 + $0x20] sm:$0xff]
    %v1261 = vld [vmem:[%s1255 + $0x28] sm:$0xff]
    %v1262 = vld [vmem:[%s1255 + $0x30] sm:$0xff]
    %v1263 = vld [vmem:[%s1255 + $0x38] sm:$0xff]
    %v1264 = vld [vmem:[%s1255 + $0x40] sm:$0xff]
    %v1265 = vld [vmem:[%s1255 + $0x48] sm:$0xff]
    %v1266 = vld [vmem:[%s1255 + $0x50] sm:$0xff]
    %v1267 = vld [vmem:[%s1255 + $0x58] sm:$0xff]
    %v1268 = vld [vmem:[%s1255 + $0x60] sm:$0xff]
    %v1269 = vld [vmem:[%s1255 + $0x68] sm:$0xff]
    %v1270 = vld [vmem:[%s1255 + $0x70] sm:$0xff]
    %v1271 = vld [vmem:[%s1255 + $0x78] sm:$0xff]
    %1272 = vmatprep.subr.mxu0 %v1257
    %1273 = vmatpush1.msra.mxu0 %v1256
    %1274 = vmatprep.subr.mxu0 %v1259
    %1275 = vmatpush1.msra.mxu0 %v1258
    %1276 = vmatprep.subr.mxu0 %v1261
    %1277 = vmatpush1.msra.mxu0 %v1260
    %1278 = vmatprep.subr.mxu0 %v1263
    %1279 = vmatpush1.msra.mxu0 %v1262
    %1280 = vmatprep.subr.mxu0 %v1265
    %1281 = vmatpush1.msra.mxu0 %v1264
    %1282 = vmatprep.subr.mxu0 %v1267
    %1283 = vmatpush1.msra.mxu0 %v1266
    %1284 = vmatprep.subr.mxu0 %v1269
    %1285 = vmatpush1.msra.mxu0 %v1268
    %1286 = vmatprep.subr.mxu0 %v1271
    %1287 = vmatpush1.msra.mxu0 %v1270
    %1288 = vmatprep.subr.mxu0 0.0
    %1289 = vmatpush1.msra.mxu0 0.0
    %1290 = vmatprep.subr.mxu0 0.0
    %1291 = vmatpush1.msra.mxu0 0.0
    %1292 = vmatprep.subr.mxu0 0.0
    %1293 = vmatpush1.msra.mxu0 0.0
    %1294 = vmatprep.subr.mxu0 0.0
    %1295 = vmatpush1.msra.mxu0 0.0
    %1296 = vmatprep.subr.mxu0 0.0
    %1297 = vmatpush1.msra.mxu0 0.0
    %1298 = vmatprep.subr.mxu0 0.0
    %1299 = vmatpush1.msra.mxu0 0.0
    %1300 = vmatprep.subr.mxu0 0.0
    %1301 = vmatpush1.msra.mxu0 0.0
    %1302 = vmatprep.subr.mxu0 0.0
    %1303 = vmatpush1.msra.mxu0 0.0
    %1304 = vmatprep.subr.mxu0 0.0
    %1305 = vmatpush1.msra.mxu0 0.0
    %1306 = vmatprep.subr.mxu0 0.0
    %1307 = vmatpush1.msra.mxu0 0.0
    %1308 = vmatprep.subr.mxu0 0.0
    %1309 = vmatpush1.msra.mxu0 0.0
    %1310 = vmatprep.subr.mxu0 0.0
    %1311 = vmatpush1.msra.mxu0 0.0
    %1312 = vmatprep.subr.mxu0 0.0
    %1313 = vmatpush1.msra.mxu0 0.0
    %1314 = vmatprep.subr.mxu0 0.0
    %1315 = vmatpush1.msra.mxu0 0.0
    %1316 = vmatprep.subr.mxu0 0.0
    %1317 = vmatpush1.msra.mxu0 0.0
    %1318 = vmatprep.subr.mxu0 0.0
    %1319 = vmatpush1.msra.mxu0 0.0
    %1320 = vmatprep.subr.mxu0 0.0
    %1321 = vmatpush1.msra.mxu0 0.0
    %1322 = vmatprep.subr.mxu0 0.0
    %1323 = vmatpush1.msra.mxu0 0.0
    %1324 = vmatprep.subr.mxu0 0.0
    %1325 = vmatpush1.msra.mxu0 0.0
    %1326 = vmatprep.subr.mxu0 0.0
    %1327 = vmatpush1.msra.mxu0 0.0
    %1328 = vmatprep.subr.mxu0 0.0
    %1329 = vmatpush1.msra.mxu0 0.0
    %1330 = vmatprep.subr.mxu0 0.0
    %1331 = vmatpush1.msra.mxu0 0.0
    %1332 = vmatprep.subr.mxu0 0.0
    %1333 = vmatpush1.msra.mxu0 0.0
    %1334 = vmatprep.subr.mxu0 0.0
    %1335 = vmatpush1.msra.mxu0 0.0
    %1336 = vmatprep.mubr.f32.mxu0 0.0
    %1337 = vmatmul.mubr.f32.gmra.mrb[0].mxu0 %v243
    %v1338 = vpop.f32.mrb[0].mxu0
    %v1339 = vadd.f32 0.0, %v1338
    %v1340 = vpop.f32.mrb[0].mxu0
    %v1341 = vadd.f32 0.0, %v1340
    %1342 = vdwg.mxu0
    %v1343 = vadd.f32 %v1251, %v1339
    %v1344 = vadd.f32 %v1253, %v1341
    %v1345 = vxor.u32 %v1343, 2147483648
    %v1346 = vxor.u32 %v1344, 2147483648
    %v1347 = vmul.f32 %v1345, 1.442695
    %v1348 = vpow.pop %v1347
    %v1349 = vmul.f32 %v1346, 1.442695
    %v1350 = vpow.pop %v1349
    %v1351 = vadd.f32 %v1348, 1.0
    %v1352 = vadd.f32 %v1350, 1.0
    %v1353 = vrcp.pop %v1351
    %v1354 = vmul.f32 1.0, %v1353
    %v1355 = vrcp.pop %v1352
    %v1356 = vmul.f32 1.0, %v1355
    %v1357 = vtanh.pop %v1344
    %v1358 = vmul.f32 %v1354, 0.0
    %1360 = vrot.lane.b32.xlu0 %v1357, 64
    %v1361 = vpop.permute.xlu0 %1360
    %v1363 = vmul.f32 %v1354, %v1361
    %1365 = vrot.lane.b32.xlu0 %v1363, 64
    %v1366 = vpop.permute.xlu0 %1365
    %v1368 = vadd.f32 %v1358, %v1366
    %v1369 = vtanh.pop %v1368
    %1371 = vrot.lane.b32.xlu0 %v1369, 64
    %v1372 = vpop.permute.xlu0 %1371
    %v1374 = vmul.f32 %v1356, %v1372
    %1375 = vst.msk [vmem:[#allocation2] sm:$0xf] %vm348, %v1374
    %v1377 = vsel %vm241, %v1374, 0
    %1379 = vmatprep.subr.mxu0 %v1257
    %1380 = vmatpush1.msra.mxu0 %v1256
    %1381 = vmatprep.subr.mxu0 %v1259
    %1382 = vmatpush1.msra.mxu0 %v1258
    %1383 = vmatprep.subr.mxu0 %v1261
    %1384 = vmatpush1.msra.mxu0 %v1260
    %1385 = vmatprep.subr.mxu0 %v1263
    %1386 = vmatpush1.msra.mxu0 %v1262
    %1387 = vmatprep.subr.mxu0 %v1265
    %1388 = vmatpush1.msra.mxu0 %v1264
    %1389 = vmatprep.subr.mxu0 %v1267
    %1390 = vmatpush1.msra.mxu0 %v1266
    %1391 = vmatprep.subr.mxu0 %v1269
    %1392 = vmatpush1.msra.mxu0 %v1268
    %1393 = vmatprep.subr.mxu0 %v1271
    %1394 = vmatpush1.msra.mxu0 %v1270
    %1395 = vmatprep.subr.mxu0 0.0
    %1396 = vmatpush1.msra.mxu0 0.0
    %1397 = vmatprep.subr.mxu0 0.0
    %1398 = vmatpush1.msra.mxu0 0.0
    %1399 = vmatprep.subr.mxu0 0.0
    %1400 = vmatpush1.msra.mxu0 0.0
    %1401 = vmatprep.subr.mxu0 0.0
    %1402 = vmatpush1.msra.mxu0 0.0
    %1403 = vmatprep.subr.mxu0 0.0
    %1404 = vmatpush1.msra.mxu0 0.0
    %1405 = vmatprep.subr.mxu0 0.0
    %1406 = vmatpush1.msra.mxu0 0.0
    %1407 = vmatprep.subr.mxu0 0.0
    %1408 = vmatpush1.msra.mxu0 0.0
    %1409 = vmatprep.subr.mxu0 0.0
    %1410 = vmatpush1.msra.mxu0 0.0
    %1411 = vmatprep.subr.mxu0 0.0
    %1412 = vmatpush1.msra.mxu0 0.0
    %1413 = vmatprep.subr.mxu0 0.0
    %1414 = vmatpush1.msra.mxu0 0.0
    %1415 = vmatprep.subr.mxu0 0.0
    %1416 = vmatpush1.msra.mxu0 0.0
    %1417 = vmatprep.subr.mxu0 0.0
    %1418 = vmatpush1.msra.mxu0 0.0
    %1419 = vmatprep.subr.mxu0 0.0
    %1420 = vmatpush1.msra.mxu0 0.0
    %1421 = vmatprep.subr.mxu0 0.0
    %1422 = vmatpush1.msra.mxu0 0.0
    %1423 = vmatprep.subr.mxu0 0.0
    %1424 = vmatpush1.msra.mxu0 0.0
    %1425 = vmatprep.subr.mxu0 0.0
    %1426 = vmatpush1.msra.mxu0 0.0
    %1427 = vmatprep.subr.mxu0 0.0
    %1428 = vmatpush1.msra.mxu0 0.0
    %1429 = vmatprep.subr.mxu0 0.0
    %1430 = vmatpush1.msra.mxu0 0.0
    %1431 = vmatprep.subr.mxu0 0.0
    %1432 = vmatpush1.msra.mxu0 0.0
    %1433 = vmatprep.subr.mxu0 0.0
    %1434 = vmatpush1.msra.mxu0 0.0
    %1435 = vmatprep.subr.mxu0 0.0
    %1436 = vmatpush1.msra.mxu0 0.0
    %1437 = vmatprep.subr.mxu0 0.0
    %1438 = vmatpush1.msra.mxu0 0.0
    %1439 = vmatprep.subr.mxu0 0.0
    %1440 = vmatpush1.msra.mxu0 0.0
    %1441 = vmatprep.subr.mxu0 0.0
    %1442 = vmatpush1.msra.mxu0 0.0
    %1443 = vmatprep.mubr.f32.mxu0 0.0
    %1444 = vmatmul.mubr.f32.gmra.mrb[0].mxu0 %v1377
    %v1445 = vpop.f32.mrb[0].mxu0
    %v1446 = vadd.f32 0.0, %v1445
    %v1447 = vpop.f32.mrb[0].mxu0
    %v1448 = vadd.f32 0.0, %v1447
    %1449 = vdwg.mxu0
    %v1452 = vrot.slane %v1446, 4
    %v1453 = vrot.slane %v1448, 4
    %v1456 = vadd.f32 %v1251, %v1452
    %v1457 = vadd.f32 %v1253, %v1453
    %v1458 = vxor.u32 %v1456, 2147483648
    %v1459 = vxor.u32 %v1457, 2147483648
    %v1460 = vmul.f32 %v1458, 1.442695
    %v1461 = vpow.pop %v1460
    %v1462 = vmul.f32 %v1459, 1.442695
    %v1463 = vpow.pop %v1462
    %v1464 = vadd.f32 %v1461, 1.0
    %v1465 = vadd.f32 %v1463, 1.0
    %v1466 = vrcp.pop %v1464
    %v1467 = vmul.f32 1.0, %v1466
    %v1468 = vrcp.pop %v1465
    %v1469 = vmul.f32 1.0, %v1468
    %v1470 = vtanh.pop %v1457
    %v1472 = vrot.slane %v1368, 4
    %v1474 = vmul.f32 %v1467, %v1472
    %1476 = vrot.lane.b32.xlu0 %v1470, 64
    %v1477 = vpop.permute.xlu0 %1476
    %v1479 = vmul.f32 %v1467, %v1477
    %1481 = vrot.lane.b32.xlu0 %v1479, 64
    %v1482 = vpop.permute.xlu0 %1481
    %v1484 = vadd.f32 %v1474, %v1482
    %v1485 = vtanh.pop %v1484
    %1487 = vrot.lane.b32.xlu0 %v1485, 64
    %v1488 = vpop.permute.xlu0 %1487
    %v1490 = vmul.f32 %v1469, %v1488
    %1491 = vst.msk [vmem:[#allocation2] sm:$0xf0] %vm465, %v1490
    %v1492 = vld [vmem:[#allocation2] sm:$0xff]
    %s1493 = scalar_lea.vmem [#allocation7], 384
    %v1494 = vld [vmem:[%s1493] sm:$0xff]
    %v1495 = vld [vmem:[%s1493 + $0x8] sm:$0xff]
    %v1496 = vld [vmem:[%s1493 + $0x10] sm:$0xff]
    %v1497 = vld [vmem:[%s1493 + $0x18] sm:$0xff]
    %v1498 = vld [vmem:[%s1493 + $0x20] sm:$0xff]
    %v1499 = vld [vmem:[%s1493 + $0x28] sm:$0xff]
    %v1500 = vld [vmem:[%s1493 + $0x30] sm:$0xff]
    %v1501 = vld [vmem:[%s1493 + $0x38] sm:$0xff]
    %v1502 = vld [vmem:[%s1493 + $0x40] sm:$0xff]
    %v1503 = vld [vmem:[%s1493 + $0x48] sm:$0xff]
    %v1504 = vld [vmem:[%s1493 + $0x50] sm:$0xff]
    %v1505 = vld [vmem:[%s1493 + $0x58] sm:$0xff]
    %v1506 = vld [vmem:[%s1493 + $0x60] sm:$0xff]
    %v1507 = vld [vmem:[%s1493 + $0x68] sm:$0xff]
    %v1508 = vld [vmem:[%s1493 + $0x70] sm:$0xff]
    %v1509 = vld [vmem:[%s1493 + $0x78] sm:$0xff]
    %s1510 = scalar_lea.vmem %s4, 8
    %v1511 = vld [vmem:[%s1510] sm:$0x3]
    %v1513 = vlaneseq
    %v1514 = vshrl.u32 %v1513, 7
    %v1515 = vsub.s32 0, %v1514
    %v1516 = vrot.slane %v1511, %v1515
    %v1517 = vlaneseq
    %v1518 = vshrl.u32 %v1517, 7
    %v1519 = vsub.s32 1, %v1518
    %v1520 = vrot.slane %v1511, %v1519
    %v1524 = vsel %vm241, %v1492, 0
    %1526 = vmatprep.subr.mxu0 %v1495
    %1527 = vmatpush1.msra.mxu0 %v1494
    %1528 = vmatprep.subr.mxu0 %v1497
    %1529 = vmatpush1.msra.mxu0 %v1496
    %1530 = vmatprep.subr.mxu0 %v1499
    %1531 = vmatpush1.msra.mxu0 %v1498
    %1532 = vmatprep.subr.mxu0 %v1501
    %1533 = vmatpush1.msra.mxu0 %v1500
    %1534 = vmatprep.subr.mxu0 %v1503
    %1535 = vmatpush1.msra.mxu0 %v1502
    %1536 = vmatprep.subr.mxu0 %v1505
    %1537 = vmatpush1.msra.mxu0 %v1504
    %1538 = vmatprep.subr.mxu0 %v1507
    %1539 = vmatpush1.msra.mxu0 %v1506
    %1540 = vmatprep.subr.mxu0 %v1509
    %1541 = vmatpush1.msra.mxu0 %v1508
    %1542 = vmatprep.subr.mxu0 0.0
    %1543 = vmatpush1.msra.mxu0 0.0
    %1544 = vmatprep.subr.mxu0 0.0
    %1545 = vmatpush1.msra.mxu0 0.0
    %1546 = vmatprep.subr.mxu0 0.0
    %1547 = vmatpush1.msra.mxu0 0.0
    %1548 = vmatprep.subr.mxu0 0.0
    %1549 = vmatpush1.msra.mxu0 0.0
    %1550 = vmatprep.subr.mxu0 0.0
    %1551 = vmatpush1.msra.mxu0 0.0
    %1552 = vmatprep.subr.mxu0 0.0
    %1553 = vmatpush1.msra.mxu0 0.0
    %1554 = vmatprep.subr.mxu0 0.0
    %1555 = vmatpush1.msra.mxu0 0.0
    %1556 = vmatprep.subr.mxu0 0.0
    %1557 = vmatpush1.msra.mxu0 0.0
    %1558 = vmatprep.subr.mxu0 0.0
    %1559 = vmatpush1.msra.mxu0 0.0
    %1560 = vmatprep.subr.mxu0 0.0
    %1561 = vmatpush1.msra.mxu0 0.0
    %1562 = vmatprep.subr.mxu0 0.0
    %1563 = vmatpush1.msra.mxu0 0.0
    %1564 = vmatprep.subr.mxu0 0.0
    %1565 = vmatpush1.msra.mxu0 0.0
    %1566 = vmatprep.subr.mxu0 0.0
    %1567 = vmatpush1.msra.mxu0 0.0
    %1568 = vmatprep.subr.mxu0 0.0
    %1569 = vmatpush1.msra.mxu0 0.0
    %1570 = vmatprep.subr.mxu0 0.0
    %1571 = vmatpush1.msra.mxu0 0.0
    %1572 = vmatprep.subr.mxu0 0.0
    %1573 = vmatpush1.msra.mxu0 0.0
    %1574 = vmatprep.subr.mxu0 0.0
    %1575 = vmatpush1.msra.mxu0 0.0
    %1576 = vmatprep.subr.mxu0 0.0
    %1577 = vmatpush1.msra.mxu0 0.0
    %1578 = vmatprep.subr.mxu0 0.0
    %1579 = vmatpush1.msra.mxu0 0.0
    %1580 = vmatprep.subr.mxu0 0.0
    %1581 = vmatpush1.msra.mxu0 0.0
    %1582 = vmatprep.subr.mxu0 0.0
    %1583 = vmatpush1.msra.mxu0 0.0
    %1584 = vmatprep.subr.mxu0 0.0
    %1585 = vmatpush1.msra.mxu0 0.0
    %1586 = vmatprep.subr.mxu0 0.0
    %1587 = vmatpush1.msra.mxu0 0.0
    %1588 = vmatprep.subr.mxu0 0.0
    %1589 = vmatpush1.msra.mxu0 0.0
    %1590 = vmatprep.mubr.f32.mxu0 0.0
    %1591 = vmatmul.mubr.f32.gmra.mrb[0].mxu0 %v1524
    %v1592 = vpop.f32.mrb[0].mxu0
    %v1593 = vadd.f32 %v1516, %v1592
    %v1594 = vpop.f32.mrb[0].mxu0
    %v1595 = vadd.f32 %v1520, %v1594
    %1596 = vdwg.mxu0
    %s1597 = scalar_lea.vmem [#allocation9], 512
    %v1598 = vld [vmem:[%s1597] sm:$0xff]
    %v1599 = vld [vmem:[%s1597 + $0x8] sm:$0xff]
    %v1600 = vld [vmem:[%s1597 + $0x10] sm:$0xff]
    %v1601 = vld [vmem:[%s1597 + $0x18] sm:$0xff]
    %v1602 = vld [vmem:[%s1597 + $0x20] sm:$0xff]
    %v1603 = vld [vmem:[%s1597 + $0x28] sm:$0xff]
    %v1604 = vld [vmem:[%s1597 + $0x30] sm:$0xff]
    %v1605 = vld [vmem:[%s1597 + $0x38] sm:$0xff]
    %v1606 = vld [vmem:[%s1597 + $0x40] sm:$0xff]
    %v1607 = vld [vmem:[%s1597 + $0x48] sm:$0xff]
    %v1608 = vld [vmem:[%s1597 + $0x50] sm:$0xff]
    %v1609 = vld [vmem:[%s1597 + $0x58] sm:$0xff]
    %v1610 = vld [vmem:[%s1597 + $0x60] sm:$0xff]
    %v1611 = vld [vmem:[%s1597 + $0x68] sm:$0xff]
    %v1612 = vld [vmem:[%s1597 + $0x70] sm:$0xff]
    %v1613 = vld [vmem:[%s1597 + $0x78] sm:$0xff]
    %1614 = vmatprep.subr.mxu0 %v1599
    %1615 = vmatpush1.msra.mxu0 %v1598
    %1616 = vmatprep.subr.mxu0 %v1601
    %1617 = vmatpush1.msra.mxu0 %v1600
    %1618 = vmatprep.subr.mxu0 %v1603
    %1619 = vmatpush1.msra.mxu0 %v1602
    %1620 = vmatprep.subr.mxu0 %v1605
    %1621 = vmatpush1.msra.mxu0 %v1604
    %1622 = vmatprep.subr.mxu0 %v1607
    %1623 = vmatpush1.msra.mxu0 %v1606
    %1624 = vmatprep.subr.mxu0 %v1609
    %1625 = vmatpush1.msra.mxu0 %v1608
    %1626 = vmatprep.subr.mxu0 %v1611
    %1627 = vmatpush1.msra.mxu0 %v1610
    %1628 = vmatprep.subr.mxu0 %v1613
    %1629 = vmatpush1.msra.mxu0 %v1612
    %1630 = vmatprep.subr.mxu0 0.0
    %1631 = vmatpush1.msra.mxu0 0.0
    %1632 = vmatprep.subr.mxu0 0.0
    %1633 = vmatpush1.msra.mxu0 0.0
    %1634 = vmatprep.subr.mxu0 0.0
    %1635 = vmatpush1.msra.mxu0 0.0
    %1636 = vmatprep.subr.mxu0 0.0
    %1637 = vmatpush1.msra.mxu0 0.0
    %1638 = vmatprep.subr.mxu0 0.0
    %1639 = vmatpush1.msra.mxu0 0.0
    %1640 = vmatprep.subr.mxu0 0.0
    %1641 = vmatpush1.msra.mxu0 0.0
    %1642 = vmatprep.subr.mxu0 0.0
    %1643 = vmatpush1.msra.mxu0 0.0
    %1644 = vmatprep.subr.mxu0 0.0
    %1645 = vmatpush1.msra.mxu0 0.0
    %1646 = vmatprep.subr.mxu0 0.0
    %1647 = vmatpush1.msra.mxu0 0.0
    %1648 = vmatprep.subr.mxu0 0.0
    %1649 = vmatpush1.msra.mxu0 0.0
    %1650 = vmatprep.subr.mxu0 0.0
    %1651 = vmatpush1.msra.mxu0 0.0
    %1652 = vmatprep.subr.mxu0 0.0
    %1653 = vmatpush1.msra.mxu0 0.0
    %1654 = vmatprep.subr.mxu0 0.0
    %1655 = vmatpush1.msra.mxu0 0.0
    %1656 = vmatprep.subr.mxu0 0.0
    %1657 = vmatpush1.msra.mxu0 0.0
    %1658 = vmatprep.subr.mxu0 0.0
    %1659 = vmatpush1.msra.mxu0 0.0
    %1660 = vmatprep.subr.mxu0 0.0
    %1661 = vmatpush1.msra.mxu0 0.0
    %1662 = vmatprep.subr.mxu0 0.0
    %1663 = vmatpush1.msra.mxu0 0.0
    %1664 = vmatprep.subr.mxu0 0.0
    %1665 = vmatpush1.msra.mxu0 0.0
    %1666 = vmatprep.subr.mxu0 0.0
    %1667 = vmatpush1.msra.mxu0 0.0
    %1668 = vmatprep.subr.mxu0 0.0
    %1669 = vmatpush1.msra.mxu0 0.0
    %1670 = vmatprep.subr.mxu0 0.0
    %1671 = vmatpush1.msra.mxu0 0.0
    %1672 = vmatprep.subr.mxu0 0.0
    %1673 = vmatpush1.msra.mxu0 0.0
    %1674 = vmatprep.subr.mxu0 0.0
    %1675 = vmatpush1.msra.mxu0 0.0
    %1676 = vmatprep.subr.mxu0 0.0
    %1677 = vmatpush1.msra.mxu0 0.0
    %1678 = vmatprep.mubr.f32.mxu0 0.0
    %1679 = vmatmul.mubr.f32.gmra.mrb[0].mxu0 %v243
    %v1680 = vpop.f32.mrb[0].mxu0
    %v1681 = vadd.f32 0.0, %v1680
    %v1682 = vpop.f32.mrb[0].mxu0
    %v1683 = vadd.f32 0.0, %v1682
    %1684 = vdwg.mxu0
    %v1685 = vadd.f32 %v1593, %v1681
    %v1686 = vadd.f32 %v1595, %v1683
    %v1687 = vxor.u32 %v1685, 2147483648
    %v1688 = vxor.u32 %v1686, 2147483648
    %v1689 = vmul.f32 %v1687, 1.442695
    %v1690 = vpow.pop %v1689
    %v1691 = vmul.f32 %v1688, 1.442695
    %v1692 = vpow.pop %v1691
    %v1693 = vadd.f32 %v1690, 1.0
    %v1694 = vadd.f32 %v1692, 1.0
    %v1695 = vrcp.pop %v1693
    %v1696 = vmul.f32 1.0, %v1695
    %v1697 = vrcp.pop %v1694
    %v1698 = vmul.f32 1.0, %v1697
    %v1699 = vtanh.pop %v1686
    %v1700 = vmul.f32 %v1696, 0.0
    %1702 = vrot.lane.b32.xlu0 %v1699, 64
    %v1703 = vpop.permute.xlu0 %1702
    %v1705 = vmul.f32 %v1696, %v1703
    %1707 = vrot.lane.b32.xlu0 %v1705, 64
    %v1708 = vpop.permute.xlu0 %1707
    %v1710 = vadd.f32 %v1700, %v1708
    %v1711 = vtanh.pop %v1710
    %1713 = vrot.lane.b32.xlu0 %v1711, 64
    %v1714 = vpop.permute.xlu0 %1713
    %v1716 = vmul.f32 %v1698, %v1714
    %1717 = vst.msk [vmem:[#allocation3] sm:$0xf] %vm348, %v1716
    %v1719 = vsel %vm241, %v1716, 0
    %1721 = vmatprep.subr.mxu0 %v1599
    %1722 = vmatpush1.msra.mxu0 %v1598
    %1723 = vmatprep.subr.mxu0 %v1601
    %1724 = vmatpush1.msra.mxu0 %v1600
    %1725 = vmatprep.subr.mxu0 %v1603
    %1726 = vmatpush1.msra.mxu0 %v1602
    %1727 = vmatprep.subr.mxu0 %v1605
    %1728 = vmatpush1.msra.mxu0 %v1604
    %1729 = vmatprep.subr.mxu0 %v1607
    %1730 = vmatpush1.msra.mxu0 %v1606
    %1731 = vmatprep.subr.mxu0 %v1609
    %1732 = vmatpush1.msra.mxu0 %v1608
    %1733 = vmatprep.subr.mxu0 %v1611
    %1734 = vmatpush1.msra.mxu0 %v1610
    %1735 = vmatprep.subr.mxu0 %v1613
    %1736 = vmatpush1.msra.mxu0 %v1612
    %1737 = vmatprep.subr.mxu0 0.0
    %1738 = vmatpush1.msra.mxu0 0.0
    %1739 = vmatprep.subr.mxu0 0.0
    %1740 = vmatpush1.msra.mxu0 0.0
    %1741 = vmatprep.subr.mxu0 0.0
    %1742 = vmatpush1.msra.mxu0 0.0
    %1743 = vmatprep.subr.mxu0 0.0
    %1744 = vmatpush1.msra.mxu0 0.0
    %1745 = vmatprep.subr.mxu0 0.0
    %1746 = vmatpush1.msra.mxu0 0.0
    %1747 = vmatprep.subr.mxu0 0.0
    %1748 = vmatpush1.msra.mxu0 0.0
    %1749 = vmatprep.subr.mxu0 0.0
    %1750 = vmatpush1.msra.mxu0 0.0
    %1751 = vmatprep.subr.mxu0 0.0
    %1752 = vmatpush1.msra.mxu0 0.0
    %1753 = vmatprep.subr.mxu0 0.0
    %1754 = vmatpush1.msra.mxu0 0.0
    %1755 = vmatprep.subr.mxu0 0.0
    %1756 = vmatpush1.msra.mxu0 0.0
    %1757 = vmatprep.subr.mxu0 0.0
    %1758 = vmatpush1.msra.mxu0 0.0
    %1759 = vmatprep.subr.mxu0 0.0
    %1760 = vmatpush1.msra.mxu0 0.0
    %1761 = vmatprep.subr.mxu0 0.0
    %1762 = vmatpush1.msra.mxu0 0.0
    %1763 = vmatprep.subr.mxu0 0.0
    %1764 = vmatpush1.msra.mxu0 0.0
    %1765 = vmatprep.subr.mxu0 0.0
    %1766 = vmatpush1.msra.mxu0 0.0
    %1767 = vmatprep.subr.mxu0 0.0
    %1768 = vmatpush1.msra.mxu0 0.0
    %1769 = vmatprep.subr.mxu0 0.0
    %1770 = vmatpush1.msra.mxu0 0.0
    %1771 = vmatprep.subr.mxu0 0.0
    %1772 = vmatpush1.msra.mxu0 0.0
    %1773 = vmatprep.subr.mxu0 0.0
    %1774 = vmatpush1.msra.mxu0 0.0
    %1775 = vmatprep.subr.mxu0 0.0
    %1776 = vmatpush1.msra.mxu0 0.0
    %1777 = vmatprep.subr.mxu0 0.0
    %1778 = vmatpush1.msra.mxu0 0.0
    %1779 = vmatprep.subr.mxu0 0.0
    %1780 = vmatpush1.msra.mxu0 0.0
    %1781 = vmatprep.subr.mxu0 0.0
    %1782 = vmatpush1.msra.mxu0 0.0
    %1783 = vmatprep.subr.mxu0 0.0
    %1784 = vmatpush1.msra.mxu0 0.0
    %1785 = vmatprep.mubr.f32.mxu0 0.0
    %1786 = vmatmul.mubr.f32.gmra.mrb[0].mxu0 %v1719
    %v1787 = vpop.f32.mrb[0].mxu0
    %v1788 = vadd.f32 0.0, %v1787
    %v1789 = vpop.f32.mrb[0].mxu0
    %v1790 = vadd.f32 0.0, %v1789
    %1791 = vdwg.mxu0
    %v1794 = vrot.slane %v1788, 4
    %v1795 = vrot.slane %v1790, 4
    %v1798 = vadd.f32 %v1593, %v1794
    %v1799 = vadd.f32 %v1595, %v1795
    %v1800 = vxor.u32 %v1798, 2147483648
    %v1801 = vxor.u32 %v1799, 2147483648
    %v1802 = vmul.f32 %v1800, 1.442695
    %v1803 = vpow.pop %v1802
    %v1804 = vmul.f32 %v1801, 1.442695
    %v1805 = vpow.pop %v1804
    %v1806 = vadd.f32 %v1803, 1.0
    %v1807 = vadd.f32 %v1805, 1.0
    %v1808 = vrcp.pop %v1806
    %v1809 = vmul.f32 1.0, %v1808
    %v1810 = vrcp.pop %v1807
    %v1811 = vmul.f32 1.0, %v1810
    %v1812 = vtanh.pop %v1799
    %v1814 = vrot.slane %v1710, 4
    %v1816 = vmul.f32 %v1809, %v1814
    %1818 = vrot.lane.b32.xlu0 %v1812, 64
    %v1819 = vpop.permute.xlu0 %1818
    %v1821 = vmul.f32 %v1809, %v1819
    %1823 = vrot.lane.b32.xlu0 %v1821, 64
    %v1824 = vpop.permute.xlu0 %1823
    %v1826 = vadd.f32 %v1816, %v1824
    %v1827 = vtanh.pop %v1826
    %1829 = vrot.lane.b32.xlu0 %v1827, 64
    %v1830 = vpop.permute.xlu0 %1829
    %v1832 = vmul.f32 %v1811, %v1830
    %1834 = vrot.lane.b32.xlu0 %v1832, 64
    %v1835 = vpop.permute.xlu0 %1834
    %vm1837 = vcmask 1048068
    %1838 = vst.msk [vmem:[#allocation3 - $0x4] sm:$0xf0] %vm1837, %v1835
    %v1839 = vld [vmem:[#allocation3] sm:$0xf]
    %v1840 = vld [vmem:[#allocation10] sm:$0xff]
    %v1841 = vld [vmem:[#allocation10 + $0x8] sm:$0xff]
    %v1842 = vld [vmem:[#allocation10 + $0x10] sm:$0xff]
    %v1843 = vld [vmem:[#allocation10 + $0x18] sm:$0xff]
    %v1844 = vld [vmem:[#allocation10 + $0x20] sm:$0xff]
    %v1845 = vld [vmem:[#allocation10 + $0x28] sm:$0xff]
    %v1846 = vld [vmem:[#allocation10 + $0x30] sm:$0xff]
    %v1847 = vld [vmem:[#allocation10 + $0x38] sm:$0xff]
    %v1848 = vld [vmem:[#allocation10 + $0x40] sm:$0xff]
    %v1849 = vld [vmem:[#allocation10 + $0x48] sm:$0xff]
    %v1850 = vld [vmem:[#allocation10 + $0x50] sm:$0xff]
    %v1851 = vld [vmem:[#allocation10 + $0x58] sm:$0xff]
    %v1852 = vld [vmem:[#allocation10 + $0x60] sm:$0xff]
    %v1853 = vld [vmem:[#allocation10 + $0x68] sm:$0xff]
    %v1854 = vld [vmem:[#allocation10 + $0x70] sm:$0xff]
    %v1855 = vld [vmem:[#allocation10 + $0x78] sm:$0xff]
    %v1856 = vld [vmem:[%s6] sm:$0x1]
    %v1858 = vlaneseq
    %v1859 = vshrl.u32 %v1858, 7
    %v1860 = vsub.s32 0, %v1859
    %v1861 = vrot.slane %v1856, %v1860
    %1863 = vmatprep.subr.mxu0 0.0
    %1864 = vmatpush1.msra.mxu0 %v1840
    %1865 = vmatprep.subr.mxu0 0.0
    %1866 = vmatpush1.msra.mxu0 %v1841
    %1867 = vmatprep.subr.mxu0 0.0
    %1868 = vmatpush1.msra.mxu0 %v1842
    %1869 = vmatprep.subr.mxu0 0.0
    %1870 = vmatpush1.msra.mxu0 %v1843
    %1871 = vmatprep.subr.mxu0 0.0
    %1872 = vmatpush1.msra.mxu0 %v1844
    %1873 = vmatprep.subr.mxu0 0.0
    %1874 = vmatpush1.msra.mxu0 %v1845
    %1875 = vmatprep.subr.mxu0 0.0
    %1876 = vmatpush1.msra.mxu0 %v1846
    %1877 = vmatprep.subr.mxu0 0.0
    %1878 = vmatpush1.msra.mxu0 %v1847
    %1879 = vmatprep.subr.mxu0 0.0
    %1880 = vmatpush1.msra.mxu0 %v1848
    %1881 = vmatprep.subr.mxu0 0.0
    %1882 = vmatpush1.msra.mxu0 %v1849
    %1883 = vmatprep.subr.mxu0 0.0
    %1884 = vmatpush1.msra.mxu0 %v1850
    %1885 = vmatprep.subr.mxu0 0.0
    %1886 = vmatpush1.msra.mxu0 %v1851
    %1887 = vmatprep.subr.mxu0 0.0
    %1888 = vmatpush1.msra.mxu0 %v1852
    %1889 = vmatprep.subr.mxu0 0.0
    %1890 = vmatpush1.msra.mxu0 %v1853
    %1891 = vmatprep.subr.mxu0 0.0
    %1892 = vmatpush1.msra.mxu0 %v1854
    %1893 = vmatprep.subr.mxu0 0.0
    %1894 = vmatpush1.msra.mxu0 %v1855
    %1895 = vmatprep.subr.mxu0 0.0
    %1896 = vmatpush1.msra.mxu0 0.0
    %1897 = vmatprep.subr.mxu0 0.0
    %1898 = vmatpush1.msra.mxu0 0.0
    %1899 = vmatprep.subr.mxu0 0.0
    %1900 = vmatpush1.msra.mxu0 0.0
    %1901 = vmatprep.subr.mxu0 0.0
    %1902 = vmatpush1.msra.mxu0 0.0
    %1903 = vmatprep.subr.mxu0 0.0
    %1904 = vmatpush1.msra.mxu0 0.0
    %1905 = vmatprep.subr.mxu0 0.0
    %1906 = vmatpush1.msra.mxu0 0.0
    %1907 = vmatprep.subr.mxu0 0.0
    %1908 = vmatpush1.msra.mxu0 0.0
    %1909 = vmatprep.subr.mxu0 0.0
    %1910 = vmatpush1.msra.mxu0 0.0
    %1911 = vmatprep.subr.mxu0 0.0
    %1912 = vmatpush1.msra.mxu0 0.0
    %1913 = vmatprep.subr.mxu0 0.0
    %1914 = vmatpush1.msra.mxu0 0.0
    %1915 = vmatprep.subr.mxu0 0.0
    %1916 = vmatpush1.msra.mxu0 0.0
    %1917 = vmatprep.subr.mxu0 0.0
    %1918 = vmatpush1.msra.mxu0 0.0
    %1919 = vmatprep.subr.mxu0 0.0
    %1920 = vmatpush1.msra.mxu0 0.0
    %1921 = vmatprep.subr.mxu0 0.0
    %1922 = vmatpush1.msra.mxu0 0.0
    %1923 = vmatprep.subr.mxu0 0.0
    %1924 = vmatpush1.msra.mxu0 0.0
    %1925 = vmatprep.subr.mxu0 0.0
    %1926 = vmatpush1.msra.mxu0 0.0
    %1927 = vmatprep.mubr.f32.mxu0 0.0
    %1928 = vmatmul.mubr.f32.gmra.mrb[0].mxu0 %v1839
    %v1929 = vpop.f32.mrb[0].mxu0
    %v1930 = vadd.f32 %v1861, %v1929
    %v1931 = vpop.f32.mrb[0].mxu0
    %1932 = vdwg.mxu0
    %v1933 = vmax.f32 %v1930, 0.0
    %v1934 = vld [vmem:[#allocation12] sm:$0xff]
    %v1935 = vld [vmem:[#allocation12 + $0x8] sm:$0xff]
    %v1936 = vld [vmem:[#allocation12 + $0x10] sm:$0xff]
    %v1937 = vld [vmem:[#allocation12 + $0x18] sm:$0xff]
    %v1938 = vld [vmem:[#allocation12 + $0x20] sm:$0xff]
    %v1939 = vld [vmem:[#allocation12 + $0x28] sm:$0xff]
    %v1940 = vld [vmem:[#allocation12 + $0x30] sm:$0xff]
    %v1941 = vld [vmem:[#allocation12 + $0x38] sm:$0xff]
    %v1942 = vld [vmem:[#allocation12 + $0x40] sm:$0xff]
    %v1943 = vld [vmem:[#allocation12 + $0x48] sm:$0xff]
    %v1944 = vld [vmem:[#allocation12 + $0x50] sm:$0xff]
    %v1945 = vld [vmem:[#allocation12 + $0x58] sm:$0xff]
    %v1946 = vld [vmem:[#allocation12 + $0x60] sm:$0xff]
    %v1947 = vld [vmem:[#allocation12 + $0x68] sm:$0xff]
    %v1948 = vld [vmem:[#allocation12 + $0x70] sm:$0xff]
    %v1949 = vld [vmem:[#allocation12 + $0x78] sm:$0xff]
    %v1950 = vld [vmem:[%s8] sm:$0x1]
    %v1952 = vlaneseq
    %v1953 = vshrl.u32 %v1952, 7
    %v1954 = vsub.s32 0, %v1953
    %v1955 = vrot.slane %v1950, %v1954
    %1957 = vmatprep.subr.mxu0 0.0
    %1958 = vmatpush1.msra.mxu0 %v1934
    %1959 = vmatprep.subr.mxu0 0.0
    %1960 = vmatpush1.msra.mxu0 %v1935
    %1961 = vmatprep.subr.mxu0 0.0
    %1962 = vmatpush1.msra.mxu0 %v1936
    %1963 = vmatprep.subr.mxu0 0.0
    %1964 = vmatpush1.msra.mxu0 %v1937
    %1965 = vmatprep.subr.mxu0 0.0
    %1966 = vmatpush1.msra.mxu0 %v1938
    %1967 = vmatprep.subr.mxu0 0.0
    %1968 = vmatpush1.msra.mxu0 %v1939
    %1969 = vmatprep.subr.mxu0 0.0
    %1970 = vmatpush1.msra.mxu0 %v1940
    %1971 = vmatprep.subr.mxu0 0.0
    %1972 = vmatpush1.msra.mxu0 %v1941
    %1973 = vmatprep.subr.mxu0 0.0
    %1974 = vmatpush1.msra.mxu0 %v1942
    %1975 = vmatprep.subr.mxu0 0.0
    %1976 = vmatpush1.msra.mxu0 %v1943
    %1977 = vmatprep.subr.mxu0 0.0
    %1978 = vmatpush1.msra.mxu0 %v1944
    %1979 = vmatprep.subr.mxu0 0.0
    %1980 = vmatpush1.msra.mxu0 %v1945
    %1981 = vmatprep.subr.mxu0 0.0
    %1982 = vmatpush1.msra.mxu0 %v1946
    %1983 = vmatprep.subr.mxu0 0.0
    %1984 = vmatpush1.msra.mxu0 %v1947
    %1985 = vmatprep.subr.mxu0 0.0
    %1986 = vmatpush1.msra.mxu0 %v1948
    %1987 = vmatprep.subr.mxu0 0.0
    %1988 = vmatpush1.msra.mxu0 %v1949
    %1989 = vmatprep.subr.mxu0 0.0
    %1990 = vmatpush1.msra.mxu0 0.0
    %1991 = vmatprep.subr.mxu0 0.0
    %1992 = vmatpush1.msra.mxu0 0.0
    %1993 = vmatprep.subr.mxu0 0.0
    %1994 = vmatpush1.msra.mxu0 0.0
    %1995 = vmatprep.subr.mxu0 0.0
    %1996 = vmatpush1.msra.mxu0 0.0
    %1997 = vmatprep.subr.mxu0 0.0
    %1998 = vmatpush1.msra.mxu0 0.0
    %1999 = vmatprep.subr.mxu0 0.0
    %2000 = vmatpush1.msra.mxu0 0.0
    %2001 = vmatprep.subr.mxu0 0.0
    %2002 = vmatpush1.msra.mxu0 0.0
    %2003 = vmatprep.subr.mxu0 0.0
    %2004 = vmatpush1.msra.mxu0 0.0
    %2005 = vmatprep.subr.mxu0 0.0
    %2006 = vmatpush1.msra.mxu0 0.0
    %2007 = vmatprep.subr.mxu0 0.0
    %2008 = vmatpush1.msra.mxu0 0.0
    %2009 = vmatprep.subr.mxu0 0.0
    %2010 = vmatpush1.msra.mxu0 0.0
    %2011 = vmatprep.subr.mxu0 0.0
    %2012 = vmatpush1.msra.mxu0 0.0
    %2013 = vmatprep.subr.mxu0 0.0
    %2014 = vmatpush1.msra.mxu0 0.0
    %2015 = vmatprep.subr.mxu0 0.0
    %2016 = vmatpush1.msra.mxu0 0.0
    %2017 = vmatprep.subr.mxu0 0.0
    %2018 = vmatpush1.msra.mxu0 0.0
    %2019 = vmatprep.subr.mxu0 0.0
    %2020 = vmatpush1.msra.mxu0 0.0
    %2021 = vmatprep.mubr.f32.mxu0 0.0
    %2022 = vmatmul.mubr.f32.gmra.mrb[0].mxu0 %v1933
    %v2023 = vpop.f32.mrb[0].mxu0
    %v2024 = vadd.f32 %v1955, %v2023
    %v2025 = vpop.f32.mrb[0].mxu0
    %2026 = vdwg.mxu0
    %2027 = vst [vmem:[#allocation13] sm:$0xf] %v2024
    // Predicated region
    $region58: #{tpu_custom_call.1} parent=1 // pred_check
      _
    $region59: #{tpu_custom_call.1} parent=1 // pred_check_branch
      %2029 = sbr.rel (0) target = $region61
    $region60: #{tpu_custom_call.1} parent=1 // pred_region
      %s2031 = ssub.s32 64, 64
      %2032 = vsyncadd [#allocation6], %s2031
      %s2034 = sshll.u32 [#allocation13], 4
      %s2035 = int_to_ptr.vmem [resolvable:$true] %s2034
      %2037 = dma.vmem_to_hbm [thread:$0]  %s2035, 64, %s9, [#allocation6]
    $region61: #{tpu_custom_call.1} parent=1 // pred_fallthru
      _
    // Predicated region
    $region62: #{tpu_custom_call.1} parent=1 // pred_check
      _
    $region63: #{tpu_custom_call.1} parent=1 // pred_check_branch
      %2039 = sbr.rel (0) target = $region65
    $region64: #{tpu_custom_call.1} parent=1 // pred_region
      %2040 = dma.done [#allocation6], 64
    $region65: #{tpu_custom_call.1} parent=1 // pred_fallthru
      _
    %2041 = vsyncpa [#allocation5], 1
    %2042 = vsyncpa [#allocation8], 1
    %2043 = vsyncpa [#allocation11], 1
    %2044 = vsyncpa [#allocation6], 1

</llo_original>
